<compile_context>
chip_gen: v7x
topology: tpu7x:2x2x1
jax: 0.10.0
libtpu: 0.0.40
codegen_flags: <defaults>
</compile_context>

<pallas_src>
import functools
import math

import jax
import jax.numpy as jnp
import numpy as np
from jax import lax
from jax.experimental import pallas as pl
from jax.experimental.pallas import tpu as pltpu


def _attn_kernel(*refs, batch_block, seq_len, num_heads, head_size, with_mask):
    if with_mask:
        (x_ref, wf_ref, bf_ref, wo_ref, bo_ref, cos_ref, sin_ref, mask_ref,
         o_ref, attn_ref) = refs
        mask = mask_ref[...]                                    # (S, S) additive mask
    else:
        (x_ref, wf_ref, bf_ref, wo_ref, bo_ref, cos_ref, sin_ref,
         o_ref, attn_ref) = refs
        S = seq_len
        row = lax.broadcasted_iota(jnp.int32, (S, S), 0)
        col = lax.broadcasted_iota(jnp.int32, (S, S), 1)
        mask = jnp.where(col <= row, 0.0, -1e9).astype(jnp.float32)

    H, D = num_heads, head_size
    E = H * D
    half = E // 2
    Dh = D // 2
    S = seq_len

    # One wide fused projection: (Bt*S, E) @ (E, 3E), bf16 operands, f32 accumulate.
    # Columns: [q_even | q_odd | k_even | k_odd | v]; 1/sqrt(D) is already folded
    # into the q columns and bias on the host.
    proj = (jnp.dot(x_ref[...], wf_ref[...], preferred_element_type=jnp.float32)
            + bf_ref[...])                                      # (Bt*S, 3E) f32

    qa, qb = proj[:, :half], proj[:, half:E]
    ka, kb = proj[:, E:E + half], proj[:, E + half:2 * E]
    v = proj[:, 2 * E:]                                         # (Bt*S, E) f32

    # RoPE on the (even, odd) half planes: pure f32 VPU mul/add (no MXU, no roll).
    cos = cos_ref[...]                                          # (Bt*S, E//2)
    sin = sin_ref[...]
    qra = qa * cos - qb * sin
    qrb = qb * cos + qa * sin
    kra = ka * cos - kb * sin
    krb = kb * cos + ka * sin

    dn = (((1,), (1,)), ((), ()))                               # q @ k^T contraction
    # TODO(synk): at production H use lax.fori_loop(..., unroll=True) over heads.
    for b in range(batch_block):                                # static unroll (small)
        r0 = b * S
        for h in range(H):
            a0, a1 = h * Dh, (h + 1) * Dh
            # Single K = D contraction per head (concat of two static lane slices).
            qh = jnp.concatenate([qra[r0:r0 + S, a0:a1],
                                  qrb[r0:r0 + S, a0:a1]], axis=-1).astype(jnp.bfloat16)
            kh = jnp.concatenate([kra[r0:r0 + S, a0:a1],
                                  krb[r0:r0 + S, a0:a1]], axis=-1).astype(jnp.bfloat16)
            s = lax.dot_general(qh, kh, dn, preferred_element_type=jnp.float32)
            s = s + mask                                        # scale already folded in
            s = s - jnp.max(s, axis=-1, keepdims=True)
            p = jnp.exp(s)                                      # f32 softmax math
            p = p * pl.reciprocal(jnp.sum(p, axis=-1, keepdims=True), approx=True)
            vh = v[r0:r0 + S, h * D:(h + 1) * D].astype(jnp.bfloat16)
            attn_ref[pl.ds(r0, S), pl.ds(h * D, D)] = jnp.dot(
                p.astype(jnp.bfloat16), vh, preferred_element_type=jnp.float32)

    # Single output projection from the (Bt*S, E) scratch (torch head order).
    attn = attn_ref[...].astype(jnp.bfloat16)
    o_ref[...] = (jnp.dot(attn, wo_ref[...], preferred_element_type=jnp.float32)
                  + bo_ref[...])


def rotary_causal_self_attention(x, params, attn_mask=None, theta=10000.0,
                                 batch_block=None):
    # attn_mask=None -> canonical causal usage, mask generated in-kernel.
    # attn_mask given -> exact module semantics (arbitrary additive mask).
    squeeze = x.ndim == 2                                       # torch 2-D branch
    if squeeze:
        x = x[None]
    B, S, E = x.shape
    H = params["num_heads"]
    assert E % H == 0
    D = E // H
    assert D % 2 == 0
    Dh = D // 2
    half = E // 2
    scale = 1.0 / math.sqrt(D)

    bt = B if batch_block is None else batch_block              # batch rows per step
    assert B % bt == 0
    M = bt * S

    wq, bq = params["wq"], params["bq"]
    wk, bk = params["wk"], params["bk"]
    wv, bv = params["wv"], params["bv"]
    wo, bo = params["wo"], params["bo"]

    # torch Linear: y = x @ W^T + b.  Column-permute q/k so the kernel directly
    # produces the RoPE even ("a") / odd ("b") half planes, fold 1/sqrt(D) into q,
    # and pack q/k/v into one (E, 3E) bf16 weight + (1, 3E) f32 bias.
    idx_a = (np.arange(H, dtype=np.int32)[:, None] * D
             + 2 * np.arange(Dh, dtype=np.int32)[None, :]).reshape(-1)
    idx_b = idx_a + 1

    wqt, wkt = wq.T, wk.T
    w_fused = jnp.concatenate(
        [wqt[:, idx_a] * scale, wqt[:, idx_b] * scale,
         wkt[:, idx_a], wkt[:, idx_b], wv.T], axis=1).astype(jnp.bfloat16)   # (E, 3E)
    b_fused = jnp.concatenate(
        [bq[idx_a] * scale, bq[idx_b] * scale,
         bk[idx_a], bk[idx_b], bv]).reshape(1, 3 * E).astype(jnp.float32)    # (1, 3E)
    wo_t = wo.T.astype(jnp.bfloat16)
    bo_r = bo.reshape(1, E).astype(jnp.float32)

    # RoPE tables in the half-plane layout, tiled over heads and the batch rows
    # handled per grid step: (bt*S, E/2), f32.
    freqs = 1.0 / theta ** (jnp.arange(0, D, 2, dtype=jnp.float32) / D)      # (D/2,)
    ang = jnp.arange(S, dtype=jnp.float32)[:, None] * freqs[None, :]         # (S, D/2)
    cos = jnp.tile(jnp.cos(ang), (bt, H))
    sin = jnp.tile(jnp.sin(ang), (bt, H))

    x2 = x.reshape(B * S, E).astype(jnp.bfloat16)               # flattened rows, bf16

    with_mask = attn_mask is not None
    kernel = functools.partial(_attn_kernel, batch_block=bt, seq_len=S,
                               num_heads=H, head_size=D, with_mask=with_mask)

    inputs = [x2, w_fused, b_fused, wo_t, bo_r, cos, sin]
    in_specs = [
        pl.BlockSpec((M, E), lambda i: (i, 0)),                 # x rows
        pl.BlockSpec((E, 3 * E), lambda i: (0, 0)),             # fused qkv weight
        pl.BlockSpec((1, 3 * E), lambda i: (0, 0)),             # fused qkv bias
        pl.BlockSpec((E, E), lambda i: (0, 0)),                 # wo
        pl.BlockSpec((1, E), lambda i: (0, 0)),                 # bo
        pl.BlockSpec((M, half), lambda i: (0, 0)),              # cos
        pl.BlockSpec((M, half), lambda i: (0, 0)),              # sin
    ]
    if with_mask:
        # TODO(synk): at production S, generate the causal part in-kernel and only
        #             DMA a tiled (bf16 / length-encoded) extra additive mask.
        inputs.append(attn_mask.astype(jnp.float32))
        in_specs.append(pl.BlockSpec((S, S), lambda i: (0, 0)))

    flops = B * (8 * S * E * E + 4 * H * S * S * D)
    bytes_accessed = (2 * B * S * E + 4 * B * S * E + 2 * 4 * E * E + 4 * 4 * E
                      + 2 * 4 * M * half + (4 * S * S if with_mask else 0))
    cost = pl.CostEstimate(flops=int(flops), transcendentals=int(B * H * S * S),
                           bytes_accessed=int(bytes_accessed))

    out = pl.pallas_call(
        kernel,
        out_shape=jax.ShapeDtypeStruct((B * S, E), jnp.float32),
        grid_spec=pltpu.PrefetchScalarGridSpec(
            num_scalar_prefetch=0,
            grid=(B // bt,),
            in_specs=in_specs,
            out_specs=pl.BlockSpec((M, E), lambda i: (i, 0)),
            scratch_shapes=[pltpu.VMEM((M, E), jnp.float32)],   # per-head PV results
        ),
        compiler_params=pltpu.CompilerParams(dimension_semantics=("parallel",)),
        cost_estimate=cost,
    )(*inputs)
    out = out.reshape(B, S, E)
    return out[0] if squeeze else out


def reference(x, params, attn_mask, theta=10000.0):
    """Pure-JAX f32 reference matching the PyTorch forward (eval mode)."""
    B, S, E = x.shape
    H = params["num_heads"]
    D = E // H

    def lin(t, w, b):
        return t @ w.T + b

    q = lin(x, params["wq"], params["bq"]).reshape(B, S, H, D).transpose(0, 2, 1, 3)
    k = lin(x, params["wk"], params["bk"]).reshape(B, S, H, D).transpose(0, 2, 1, 3)
    v = lin(x, params["wv"], params["bv"]).reshape(B, S, H, D).transpose(0, 2, 1, 3)

    freqs = 1.0 / theta ** (jnp.arange(0, D, 2, dtype=jnp.float32) / D)
    ang = jnp.arange(S, dtype=jnp.float32)[:, None] * freqs[None, :]
    cos, sin = jnp.cos(ang), jnp.sin(ang)

    def rope(t):
        a, b2 = t[..., 0::2], t[..., 1::2]
        out = jnp.stack([a * cos - b2 * sin, a * sin + b2 * cos], axis=-1)
        return out.reshape(t.shape)

    q, k = rope(q), rope(k)
    s = jnp.einsum("bhqd,bhkd->bhqk", q, k) / math.sqrt(D) + attn_mask
    p = jax.nn.softmax(s, axis=-1)
    o = jnp.einsum("bhqk,bhkd->bhqd", p, v)
    o = o.transpose(0, 2, 1, 3).reshape(B, S, E)
    return o @ params["wo"].T + params["bo"]


if __name__ == "__main__":
    B, S, E, H = 2, 8, 32, 4  # batch, seq, embedding_size, num_heads (head_size = 8)

    key = jax.random.PRNGKey(0)
    keys = jax.random.split(key, 10)
    xavier_std = math.sqrt(2.0 / (E + E))     # xavier_normal_ for (E, E) Linear weights
    bbound = 1.0 / math.sqrt(E)               # PyTorch default bias init range

    params = {
        "num_heads": H,
        "wq": xavier_std * jax.random.normal(keys[0], (E, E), jnp.float32),
        "wk": xavier_std * jax.random.normal(keys[1], (E, E), jnp.float32),
        "wv": xavier_std * jax.random.normal(keys[2], (E, E), jnp.float32),
        "wo": xavier_std * jax.random.normal(keys[3], (E, E), jnp.float32),
        "bq": jax.random.uniform(keys[4], (E,), jnp.float32, -bbound, bbound),
        "bk": jax.random.uniform(keys[5], (E,), jnp.float32, -bbound, bbound),
        "bv": jax.random.uniform(keys[6], (E,), jnp.float32, -bbound, bbound),
        "bo": jax.random.uniform(keys[7], (E,), jnp.float32, -bbound, bbound),
    }

    x = jax.random.normal(keys[8], (B, S, E), jnp.float32)
    # additive causal mask (0 on/below diagonal, large negative above)
    causal_mask = jnp.where(jnp.tril(jnp.ones((S, S), dtype=bool)), 0.0, -1e9
                            ).astype(jnp.float32)

    ref = reference(x, params, causal_mask)

    # Tolerances reflect the intentional bf16 MXU operands (x, weights, q/k score
    # operands, softmax probabilities) and the approximate EUP reciprocal in the
    # softmax, compared against a pure-f32 reference.  Switch operands back to f32
    # and use an exact divide if bit-level parity with the torch module is needed.
    TOL = dict(rtol=5e-2, atol=5e-2)

    # Path 1: causal mask generated in-kernel (no (S,S) mask DMA).
    out = jax.block_until_ready(rotary_causal_self_attention(x, params))
    np.testing.assert_allclose(np.asarray(out), np.asarray(ref), **TOL)

    # Path 2: explicit additive attn_mask (full module semantics).
    out2 = jax.block_until_ready(
        rotary_causal_self_attention(x, params, attn_mask=causal_mask))
    np.testing.assert_allclose(np.asarray(out2), np.asarray(ref), **TOL)

    print("KERNEL_OK")
</pallas_src>

<mosaic_0001>
module attributes {stable_mosaic.version = 11 : i64} {
  func.func @_attn_kernel(%arg0: i32, %arg1: memref<16x32xbf16, #tpu.memory_space<vmem>>, %arg2: memref<32x96xbf16, #tpu.memory_space<vmem>>, %arg3: memref<1x96xf32, #tpu.memory_space<vmem>>, %arg4: memref<32x32xbf16, #tpu.memory_space<vmem>>, %arg5: memref<1x32xf32, #tpu.memory_space<vmem>>, %arg6: memref<16x16xf32, #tpu.memory_space<vmem>>, %arg7: memref<16x16xf32, #tpu.memory_space<vmem>>, %arg8: memref<16x32xf32, #tpu.memory_space<vmem>>, %arg9: memref<16x32xf32, #tpu.memory_space<vmem>>) attributes {dimension_semantics = [#tpu.dimension_semantics<parallel>], iteration_bounds = array<i64: 1>, scalar_prefetch = 0 : i64, scratch_operands = 1 : i64, tpu.core_type = #tpu.core_type<tc>, window_params = [{transform_indices = @transform_0, window_bounds = array<i64: 16, 32>}, {pipeline_mode = #tpu.pipeline_mode<synchronous>, transform_indices = @transform_1, window_bounds = array<i64: 32, 96>}, {pipeline_mode = #tpu.pipeline_mode<synchronous>, transform_indices = @transform_2, window_bounds = array<i64: 1, 96>}, {pipeline_mode = #tpu.pipeline_mode<synchronous>, transform_indices = @transform_3, window_bounds = array<i64: 32, 32>}, {pipeline_mode = #tpu.pipeline_mode<synchronous>, transform_indices = @transform_4, window_bounds = array<i64: 1, 32>}, {pipeline_mode = #tpu.pipeline_mode<synchronous>, transform_indices = @transform_5, window_bounds = array<i64: 16, 16>}, {pipeline_mode = #tpu.pipeline_mode<synchronous>, transform_indices = @transform_6, window_bounds = array<i64: 16, 16>}, {transform_indices = @transform_7, window_bounds = array<i64: 16, 32>}]} {
    %0 = tpu.iota {dimensions = array<i32: 0>} : vector<8x8xi32>
    %1 = tpu.iota {dimensions = array<i32: 1>} : vector<8x8xi32>
    %2 = arith.cmpi sle, %1, %0 : vector<8x8xi32>
    %cst = arith.constant 0.000000e+00 : f32
    %cst_0 = arith.constant -1.000000e+09 : f32
    %3 = vector.broadcast %cst : f32 to vector<8x8xf32>
    %4 = vector.broadcast %cst_0 : f32 to vector<8x8xf32>
    %5 = arith.select %2, %3, %4 : vector<8x8xi1>, vector<8x8xf32>
    %c0 = arith.constant 0 : index
    %c0_1 = arith.constant 0 : index
    %6 = vector.load %arg1[%c0, %c0_1] : memref<16x32xbf16, #tpu.memory_space<vmem>>, vector<16x32xbf16>
    %c0_2 = arith.constant 0 : index
    %c0_3 = arith.constant 0 : index
    %7 = vector.load %arg2[%c0_2, %c0_3] : memref<32x96xbf16, #tpu.memory_space<vmem>>, vector<32x96xbf16>
    %cst_4 = arith.constant dense<0.000000e+00> : vector<16x96xf32>
    %8 = tpu.matmul %6, %7, %cst_4 {dimension_numbers = #tpu.dot_dimension_numbers<[1], [0], [0], [1], [0, 0, 1, 1], [], []>} : vector<16x32xbf16>, vector<32x96xbf16>, vector<16x96xf32> -> vector<16x96xf32>
    %c0_5 = arith.constant 0 : index
    %c0_6 = arith.constant 0 : index
    %9 = vector.load %arg3[%c0_5, %c0_6] : memref<1x96xf32, #tpu.memory_space<vmem>>, vector<1x96xf32>
    %10 = vector.broadcast %9 : vector<1x96xf32> to vector<16x96xf32>
    %11 = arith.addf %8, %10 : vector<16x96xf32>
    %12 = vector.extract_strided_slice %11 {offsets = [0, 0], sizes = [16, 16], strides = [1, 1]} : vector<16x96xf32> to vector<16x16xf32>
    %13 = vector.extract_strided_slice %11 {offsets = [0, 16], sizes = [16, 16], strides = [1, 1]} : vector<16x96xf32> to vector<16x16xf32>
    %14 = vector.extract_strided_slice %11 {offsets = [0, 32], sizes = [16, 16], strides = [1, 1]} : vector<16x96xf32> to vector<16x16xf32>
    %15 = vector.extract_strided_slice %11 {offsets = [0, 48], sizes = [16, 16], strides = [1, 1]} : vector<16x96xf32> to vector<16x16xf32>
    %16 = vector.extract_strided_slice %11 {offsets = [0, 64], sizes = [16, 32], strides = [1, 1]} : vector<16x96xf32> to vector<16x32xf32>
    %c0_7 = arith.constant 0 : index
    %c0_8 = arith.constant 0 : index
    %17 = vector.load %arg6[%c0_7, %c0_8] : memref<16x16xf32, #tpu.memory_space<vmem>>, vector<16x16xf32>
    %c0_9 = arith.constant 0 : index
    %c0_10 = arith.constant 0 : index
    %18 = vector.load %arg7[%c0_9, %c0_10] : memref<16x16xf32, #tpu.memory_space<vmem>>, vector<16x16xf32>
    %19 = arith.mulf %12, %17 : vector<16x16xf32>
    %20 = arith.mulf %13, %18 : vector<16x16xf32>
    %21 = arith.subf %19, %20 : vector<16x16xf32>
    %22 = arith.mulf %13, %17 : vector<16x16xf32>
    %23 = arith.mulf %12, %18 : vector<16x16xf32>
    %24 = arith.addf %22, %23 : vector<16x16xf32>
    %25 = arith.mulf %14, %17 : vector<16x16xf32>
    %26 = arith.mulf %15, %18 : vector<16x16xf32>
    %27 = arith.subf %25, %26 : vector<16x16xf32>
    %28 = arith.mulf %15, %17 : vector<16x16xf32>
    %29 = arith.mulf %14, %18 : vector<16x16xf32>
    %30 = arith.addf %28, %29 : vector<16x16xf32>
    %31 = vector.extract_strided_slice %21 {offsets = [0, 0], sizes = [8, 4], strides = [1, 1]} : vector<16x16xf32> to vector<8x4xf32>
    %32 = vector.extract_strided_slice %24 {offsets = [0, 0], sizes = [8, 4], strides = [1, 1]} : vector<16x16xf32> to vector<8x4xf32>
    %33 = tpu.concatenate %31, %32 in 1 : vector<8x4xf32>, vector<8x4xf32> -> vector<8x8xf32>
    %34 = arith.truncf %33 : vector<8x8xf32> to vector<8x8xbf16>
    %35 = vector.extract_strided_slice %27 {offsets = [0, 0], sizes = [8, 4], strides = [1, 1]} : vector<16x16xf32> to vector<8x4xf32>
    %36 = vector.extract_strided_slice %30 {offsets = [0, 0], sizes = [8, 4], strides = [1, 1]} : vector<16x16xf32> to vector<8x4xf32>
    %37 = tpu.concatenate %35, %36 in 1 : vector<8x4xf32>, vector<8x4xf32> -> vector<8x8xf32>
    %38 = arith.truncf %37 : vector<8x8xf32> to vector<8x8xbf16>
    %cst_11 = arith.constant dense<0.000000e+00> : vector<8x8xf32>
    %39 = tpu.matmul %34, %38, %cst_11 {dimension_numbers = #tpu.dot_dimension_numbers<[1], [1], [0], [0], [0, 0, 1, 0], [], []>} : vector<8x8xbf16>, vector<8x8xbf16>, vector<8x8xf32> -> vector<8x8xf32>
    %40 = arith.addf %39, %5 : vector<8x8xf32>
    %cst_12 = arith.constant dense<0xFF800000> : vector<8xf32>
    %41 = vector.multi_reduction <maximumf>, %40, %cst_12 [1] : vector<8x8xf32> to vector<8xf32>
    %42 = vector.shape_cast %41 : vector<8xf32> to vector<8x1xf32>
    %43 = vector.broadcast %42 : vector<8x1xf32> to vector<8x8xf32>
    %44 = arith.subf %40, %43 : vector<8x8xf32>
    %45 = math.exp %44 : vector<8x8xf32>
    %cst_13 = arith.constant dense<0.000000e+00> : vector<8xf32>
    %46 = vector.multi_reduction <add>, %45, %cst_13 [1] : vector<8x8xf32> to vector<8xf32>
    %47 = vector.shape_cast %46 : vector<8xf32> to vector<8x1xf32>
    %48 = tpu.reciprocal %47 {approx = true} : vector<8x1xf32> -> vector<8x1xf32>
    %49 = vector.broadcast %48 : vector<8x1xf32> to vector<8x8xf32>
    %50 = arith.mulf %45, %49 : vector<8x8xf32>
    %51 = vector.extract_strided_slice %16 {offsets = [0, 0], sizes = [8, 8], strides = [1, 1]} : vector<16x32xf32> to vector<8x8xf32>
    %52 = arith.truncf %51 : vector<8x8xf32> to vector<8x8xbf16>
    %53 = arith.truncf %50 : vector<8x8xf32> to vector<8x8xbf16>
    %cst_14 = arith.constant dense<0.000000e+00> : vector<8x8xf32>
    %54 = tpu.matmul %53, %52, %cst_14 {dimension_numbers = #tpu.dot_dimension_numbers<[1], [0], [0], [1], [0, 0, 1, 1], [], []>} : vector<8x8xbf16>, vector<8x8xbf16>, vector<8x8xf32> -> vector<8x8xf32>
    %c0_15 = arith.constant 0 : index
    %c0_16 = arith.constant 0 : index
    %55 = vector.load %arg9[%c0_15, %c0_16] : memref<16x32xf32, #tpu.memory_space<vmem>>, vector<8x8xf32>
    tpu.vector_store %arg9[%c0_15, %c0_16], %54 {strides = array<i32>} : memref<16x32xf32, #tpu.memory_space<vmem>>, vector<8x8xf32>,
    %56 = vector.extract_strided_slice %21 {offsets = [0, 4], sizes = [8, 4], strides = [1, 1]} : vector<16x16xf32> to vector<8x4xf32>
    %57 = vector.extract_strided_slice %24 {offsets = [0, 4], sizes = [8, 4], strides = [1, 1]} : vector<16x16xf32> to vector<8x4xf32>
    %58 = tpu.concatenate %56, %57 in 1 : vector<8x4xf32>, vector<8x4xf32> -> vector<8x8xf32>
    %59 = arith.truncf %58 : vector<8x8xf32> to vector<8x8xbf16>
    %60 = vector.extract_strided_slice %27 {offsets = [0, 4], sizes = [8, 4], strides = [1, 1]} : vector<16x16xf32> to vector<8x4xf32>
    %61 = vector.extract_strided_slice %30 {offsets = [0, 4], sizes = [8, 4], strides = [1, 1]} : vector<16x16xf32> to vector<8x4xf32>
    %62 = tpu.concatenate %60, %61 in 1 : vector<8x4xf32>, vector<8x4xf32> -> vector<8x8xf32>
    %63 = arith.truncf %62 : vector<8x8xf32> to vector<8x8xbf16>
    %cst_17 = arith.constant dense<0.000000e+00> : vector<8x8xf32>
    %64 = tpu.matmul %59, %63, %cst_17 {dimension_numbers = #tpu.dot_dimension_numbers<[1], [1], [0], [0], [0, 0, 1, 0], [], []>} : vector<8x8xbf16>, vector<8x8xbf16>, vector<8x8xf32> -> vector<8x8xf32>
    %65 = arith.addf %64, %5 : vector<8x8xf32>
    %cst_18 = arith.constant dense<0xFF800000> : vector<8xf32>
    %66 = vector.multi_reduction <maximumf>, %65, %cst_18 [1] : vector<8x8xf32> to vector<8xf32>
    %67 = vector.shape_cast %66 : vector<8xf32> to vector<8x1xf32>
    %68 = vector.broadcast %67 : vector<8x1xf32> to vector<8x8xf32>
    %69 = arith.subf %65, %68 : vector<8x8xf32>
    %70 = math.exp %69 : vector<8x8xf32>
    %cst_19 = arith.constant dense<0.000000e+00> : vector<8xf32>
    %71 = vector.multi_reduction <add>, %70, %cst_19 [1] : vector<8x8xf32> to vector<8xf32>
    %72 = vector.shape_cast %71 : vector<8xf32> to vector<8x1xf32>
    %73 = tpu.reciprocal %72 {approx = true} : vector<8x1xf32> -> vector<8x1xf32>
    %74 = vector.broadcast %73 : vector<8x1xf32> to vector<8x8xf32>
    %75 = arith.mulf %70, %74 : vector<8x8xf32>
    %76 = vector.extract_strided_slice %16 {offsets = [0, 8], sizes = [8, 8], strides = [1, 1]} : vector<16x32xf32> to vector<8x8xf32>
    %77 = arith.truncf %76 : vector<8x8xf32> to vector<8x8xbf16>
    %78 = arith.truncf %75 : vector<8x8xf32> to vector<8x8xbf16>
    %cst_20 = arith.constant dense<0.000000e+00> : vector<8x8xf32>
    %79 = tpu.matmul %78, %77, %cst_20 {dimension_numbers = #tpu.dot_dimension_numbers<[1], [0], [0], [1], [0, 0, 1, 1], [], []>} : vector<8x8xbf16>, vector<8x8xbf16>, vector<8x8xf32> -> vector<8x8xf32>
    %c0_21 = arith.constant 0 : index
    %c8 = arith.constant 8 : index
    %80 = vector.load %arg9[%c0_21, %c8] : memref<16x32xf32, #tpu.memory_space<vmem>>, vector<8x8xf32>
    tpu.vector_store %arg9[%c0_21, %c8], %79 {strides = array<i32>} : memref<16x32xf32, #tpu.memory_space<vmem>>, vector<8x8xf32>,
    %81 = vector.extract_strided_slice %21 {offsets = [0, 8], sizes = [8, 4], strides = [1, 1]} : vector<16x16xf32> to vector<8x4xf32>
    %82 = vector.extract_strided_slice %24 {offsets = [0, 8], sizes = [8, 4], strides = [1, 1]} : vector<16x16xf32> to vector<8x4xf32>
    %83 = tpu.concatenate %81, %82 in 1 : vector<8x4xf32>, vector<8x4xf32> -> vector<8x8xf32>
    %84 = arith.truncf %83 : vector<8x8xf32> to vector<8x8xbf16>
    %85 = vector.extract_strided_slice %27 {offsets = [0, 8], sizes = [8, 4], strides = [1, 1]} : vector<16x16xf32> to vector<8x4xf32>
    %86 = vector.extract_strided_slice %30 {offsets = [0, 8], sizes = [8, 4], strides = [1, 1]} : vector<16x16xf32> to vector<8x4xf32>
    %87 = tpu.concatenate %85, %86 in 1 : vector<8x4xf32>, vector<8x4xf32> -> vector<8x8xf32>
    %88 = arith.truncf %87 : vector<8x8xf32> to vector<8x8xbf16>
    %cst_22 = arith.constant dense<0.000000e+00> : vector<8x8xf32>
    %89 = tpu.matmul %84, %88, %cst_22 {dimension_numbers = #tpu.dot_dimension_numbers<[1], [1], [0], [0], [0, 0, 1, 0], [], []>} : vector<8x8xbf16>, vector<8x8xbf16>, vector<8x8xf32> -> vector<8x8xf32>
    %90 = arith.addf %89, %5 : vector<8x8xf32>
    %cst_23 = arith.constant dense<0xFF800000> : vector<8xf32>
    %91 = vector.multi_reduction <maximumf>, %90, %cst_23 [1] : vector<8x8xf32> to vector<8xf32>
    %92 = vector.shape_cast %91 : vector<8xf32> to vector<8x1xf32>
    %93 = vector.broadcast %92 : vector<8x1xf32> to vector<8x8xf32>
    %94 = arith.subf %90, %93 : vector<8x8xf32>
    %95 = math.exp %94 : vector<8x8xf32>
    %cst_24 = arith.constant dense<0.000000e+00> : vector<8xf32>
    %96 = vector.multi_reduction <add>, %95, %cst_24 [1] : vector<8x8xf32> to vector<8xf32>
    %97 = vector.shape_cast %96 : vector<8xf32> to vector<8x1xf32>
    %98 = tpu.reciprocal %97 {approx = true} : vector<8x1xf32> -> vector<8x1xf32>
    %99 = vector.broadcast %98 : vector<8x1xf32> to vector<8x8xf32>
    %100 = arith.mulf %95, %99 : vector<8x8xf32>
    %101 = vector.extract_strided_slice %16 {offsets = [0, 16], sizes = [8, 8], strides = [1, 1]} : vector<16x32xf32> to vector<8x8xf32>
    %102 = arith.truncf %101 : vector<8x8xf32> to vector<8x8xbf16>
    %103 = arith.truncf %100 : vector<8x8xf32> to vector<8x8xbf16>
    %cst_25 = arith.constant dense<0.000000e+00> : vector<8x8xf32>
    %104 = tpu.matmul %103, %102, %cst_25 {dimension_numbers = #tpu.dot_dimension_numbers<[1], [0], [0], [1], [0, 0, 1, 1], [], []>} : vector<8x8xbf16>, vector<8x8xbf16>, vector<8x8xf32> -> vector<8x8xf32>
    %c0_26 = arith.constant 0 : index
    %c16 = arith.constant 16 : index
    %105 = vector.load %arg9[%c0_26, %c16] : memref<16x32xf32, #tpu.memory_space<vmem>>, vector<8x8xf32>
    tpu.vector_store %arg9[%c0_26, %c16], %104 {strides = array<i32>} : memref<16x32xf32, #tpu.memory_space<vmem>>, vector<8x8xf32>,
    %106 = vector.extract_strided_slice %21 {offsets = [0, 12], sizes = [8, 4], strides = [1, 1]} : vector<16x16xf32> to vector<8x4xf32>
    %107 = vector.extract_strided_slice %24 {offsets = [0, 12], sizes = [8, 4], strides = [1, 1]} : vector<16x16xf32> to vector<8x4xf32>
    %108 = tpu.concatenate %106, %107 in 1 : vector<8x4xf32>, vector<8x4xf32> -> vector<8x8xf32>
    %109 = arith.truncf %108 : vector<8x8xf32> to vector<8x8xbf16>
    %110 = vector.extract_strided_slice %27 {offsets = [0, 12], sizes = [8, 4], strides = [1, 1]} : vector<16x16xf32> to vector<8x4xf32>
    %111 = vector.extract_strided_slice %30 {offsets = [0, 12], sizes = [8, 4], strides = [1, 1]} : vector<16x16xf32> to vector<8x4xf32>
    %112 = tpu.concatenate %110, %111 in 1 : vector<8x4xf32>, vector<8x4xf32> -> vector<8x8xf32>
    %113 = arith.truncf %112 : vector<8x8xf32> to vector<8x8xbf16>
    %cst_27 = arith.constant dense<0.000000e+00> : vector<8x8xf32>
    %114 = tpu.matmul %109, %113, %cst_27 {dimension_numbers = #tpu.dot_dimension_numbers<[1], [1], [0], [0], [0, 0, 1, 0], [], []>} : vector<8x8xbf16>, vector<8x8xbf16>, vector<8x8xf32> -> vector<8x8xf32>
    %115 = arith.addf %114, %5 : vector<8x8xf32>
    %cst_28 = arith.constant dense<0xFF800000> : vector<8xf32>
    %116 = vector.multi_reduction <maximumf>, %115, %cst_28 [1] : vector<8x8xf32> to vector<8xf32>
    %117 = vector.shape_cast %116 : vector<8xf32> to vector<8x1xf32>
    %118 = vector.broadcast %117 : vector<8x1xf32> to vector<8x8xf32>
    %119 = arith.subf %115, %118 : vector<8x8xf32>
    %120 = math.exp %119 : vector<8x8xf32>
    %cst_29 = arith.constant dense<0.000000e+00> : vector<8xf32>
    %121 = vector.multi_reduction <add>, %120, %cst_29 [1] : vector<8x8xf32> to vector<8xf32>
    %122 = vector.shape_cast %121 : vector<8xf32> to vector<8x1xf32>
    %123 = tpu.reciprocal %122 {approx = true} : vector<8x1xf32> -> vector<8x1xf32>
    %124 = vector.broadcast %123 : vector<8x1xf32> to vector<8x8xf32>
    %125 = arith.mulf %120, %124 : vector<8x8xf32>
    %126 = vector.extract_strided_slice %16 {offsets = [0, 24], sizes = [8, 8], strides = [1, 1]} : vector<16x32xf32> to vector<8x8xf32>
    %127 = arith.truncf %126 : vector<8x8xf32> to vector<8x8xbf16>
    %128 = arith.truncf %125 : vector<8x8xf32> to vector<8x8xbf16>
    %cst_30 = arith.constant dense<0.000000e+00> : vector<8x8xf32>
    %129 = tpu.matmul %128, %127, %cst_30 {dimension_numbers = #tpu.dot_dimension_numbers<[1], [0], [0], [1], [0, 0, 1, 1], [], []>} : vector<8x8xbf16>, vector<8x8xbf16>, vector<8x8xf32> -> vector<8x8xf32>
    %c0_31 = arith.constant 0 : index
    %c24 = arith.constant 24 : index
    %130 = vector.load %arg9[%c0_31, %c24] : memref<16x32xf32, #tpu.memory_space<vmem>>, vector<8x8xf32>
    tpu.vector_store %arg9[%c0_31, %c24], %129 {strides = array<i32>} : memref<16x32xf32, #tpu.memory_space<vmem>>, vector<8x8xf32>,
    %131 = vector.extract_strided_slice %21 {offsets = [8, 0], sizes = [8, 4], strides = [1, 1]} : vector<16x16xf32> to vector<8x4xf32>
    %132 = vector.extract_strided_slice %24 {offsets = [8, 0], sizes = [8, 4], strides = [1, 1]} : vector<16x16xf32> to vector<8x4xf32>
    %133 = tpu.concatenate %131, %132 in 1 : vector<8x4xf32>, vector<8x4xf32> -> vector<8x8xf32>
    %134 = arith.truncf %133 : vector<8x8xf32> to vector<8x8xbf16>
    %135 = vector.extract_strided_slice %27 {offsets = [8, 0], sizes = [8, 4], strides = [1, 1]} : vector<16x16xf32> to vector<8x4xf32>
    %136 = vector.extract_strided_slice %30 {offsets = [8, 0], sizes = [8, 4], strides = [1, 1]} : vector<16x16xf32> to vector<8x4xf32>
    %137 = tpu.concatenate %135, %136 in 1 : vector<8x4xf32>, vector<8x4xf32> -> vector<8x8xf32>
    %138 = arith.truncf %137 : vector<8x8xf32> to vector<8x8xbf16>
    %cst_32 = arith.constant dense<0.000000e+00> : vector<8x8xf32>
    %139 = tpu.matmul %134, %138, %cst_32 {dimension_numbers = #tpu.dot_dimension_numbers<[1], [1], [0], [0], [0, 0, 1, 0], [], []>} : vector<8x8xbf16>, vector<8x8xbf16>, vector<8x8xf32> -> vector<8x8xf32>
    %140 = arith.addf %139, %5 : vector<8x8xf32>
    %cst_33 = arith.constant dense<0xFF800000> : vector<8xf32>
    %141 = vector.multi_reduction <maximumf>, %140, %cst_33 [1] : vector<8x8xf32> to vector<8xf32>
    %142 = vector.shape_cast %141 : vector<8xf32> to vector<8x1xf32>
    %143 = vector.broadcast %142 : vector<8x1xf32> to vector<8x8xf32>
    %144 = arith.subf %140, %143 : vector<8x8xf32>
    %145 = math.exp %144 : vector<8x8xf32>
    %cst_34 = arith.constant dense<0.000000e+00> : vector<8xf32>
    %146 = vector.multi_reduction <add>, %145, %cst_34 [1] : vector<8x8xf32> to vector<8xf32>
    %147 = vector.shape_cast %146 : vector<8xf32> to vector<8x1xf32>
    %148 = tpu.reciprocal %147 {approx = true} : vector<8x1xf32> -> vector<8x1xf32>
    %149 = vector.broadcast %148 : vector<8x1xf32> to vector<8x8xf32>
    %150 = arith.mulf %145, %149 : vector<8x8xf32>
    %151 = vector.extract_strided_slice %16 {offsets = [8, 0], sizes = [8, 8], strides = [1, 1]} : vector<16x32xf32> to vector<8x8xf32>
    %152 = arith.truncf %151 : vector<8x8xf32> to vector<8x8xbf16>
    %153 = arith.truncf %150 : vector<8x8xf32> to vector<8x8xbf16>
    %cst_35 = arith.constant dense<0.000000e+00> : vector<8x8xf32>
    %154 = tpu.matmul %153, %152, %cst_35 {dimension_numbers = #tpu.dot_dimension_numbers<[1], [0], [0], [1], [0, 0, 1, 1], [], []>} : vector<8x8xbf16>, vector<8x8xbf16>, vector<8x8xf32> -> vector<8x8xf32>
    %c8_36 = arith.constant 8 : index
    %c0_37 = arith.constant 0 : index
    %155 = vector.load %arg9[%c8_36, %c0_37] : memref<16x32xf32, #tpu.memory_space<vmem>>, vector<8x8xf32>
    tpu.vector_store %arg9[%c8_36, %c0_37], %154 {strides = array<i32>} : memref<16x32xf32, #tpu.memory_space<vmem>>, vector<8x8xf32>,
    %156 = vector.extract_strided_slice %21 {offsets = [8, 4], sizes = [8, 4], strides = [1, 1]} : vector<16x16xf32> to vector<8x4xf32>
    %157 = vector.extract_strided_slice %24 {offsets = [8, 4], sizes = [8, 4], strides = [1, 1]} : vector<16x16xf32> to vector<8x4xf32>
    %158 = tpu.concatenate %156, %157 in 1 : vector<8x4xf32>, vector<8x4xf32> -> vector<8x8xf32>
    %159 = arith.truncf %158 : vector<8x8xf32> to vector<8x8xbf16>
    %160 = vector.extract_strided_slice %27 {offsets = [8, 4], sizes = [8, 4], strides = [1, 1]} : vector<16x16xf32> to vector<8x4xf32>
    %161 = vector.extract_strided_slice %30 {offsets = [8, 4], sizes = [8, 4], strides = [1, 1]} : vector<16x16xf32> to vector<8x4xf32>
    %162 = tpu.concatenate %160, %161 in 1 : vector<8x4xf32>, vector<8x4xf32> -> vector<8x8xf32>
    %163 = arith.truncf %162 : vector<8x8xf32> to vector<8x8xbf16>
    %cst_38 = arith.constant dense<0.000000e+00> : vector<8x8xf32>
    %164 = tpu.matmul %159, %163, %cst_38 {dimension_numbers = #tpu.dot_dimension_numbers<[1], [1], [0], [0], [0, 0, 1, 0], [], []>} : vector<8x8xbf16>, vector<8x8xbf16>, vector<8x8xf32> -> vector<8x8xf32>
    %165 = arith.addf %164, %5 : vector<8x8xf32>
    %cst_39 = arith.constant dense<0xFF800000> : vector<8xf32>
    %166 = vector.multi_reduction <maximumf>, %165, %cst_39 [1] : vector<8x8xf32> to vector<8xf32>
    %167 = vector.shape_cast %166 : vector<8xf32> to vector<8x1xf32>
    %168 = vector.broadcast %167 : vector<8x1xf32> to vector<8x8xf32>
    %169 = arith.subf %165, %168 : vector<8x8xf32>
    %170 = math.exp %169 : vector<8x8xf32>
    %cst_40 = arith.constant dense<0.000000e+00> : vector<8xf32>
    %171 = vector.multi_reduction <add>, %170, %cst_40 [1] : vector<8x8xf32> to vector<8xf32>
    %172 = vector.shape_cast %171 : vector<8xf32> to vector<8x1xf32>
    %173 = tpu.reciprocal %172 {approx = true} : vector<8x1xf32> -> vector<8x1xf32>
    %174 = vector.broadcast %173 : vector<8x1xf32> to vector<8x8xf32>
    %175 = arith.mulf %170, %174 : vector<8x8xf32>
    %176 = vector.extract_strided_slice %16 {offsets = [8, 8], sizes = [8, 8], strides = [1, 1]} : vector<16x32xf32> to vector<8x8xf32>
    %177 = arith.truncf %176 : vector<8x8xf32> to vector<8x8xbf16>
    %178 = arith.truncf %175 : vector<8x8xf32> to vector<8x8xbf16>
    %cst_41 = arith.constant dense<0.000000e+00> : vector<8x8xf32>
    %179 = tpu.matmul %178, %177, %cst_41 {dimension_numbers = #tpu.dot_dimension_numbers<[1], [0], [0], [1], [0, 0, 1, 1], [], []>} : vector<8x8xbf16>, vector<8x8xbf16>, vector<8x8xf32> -> vector<8x8xf32>
    %c8_42 = arith.constant 8 : index
    %c8_43 = arith.constant 8 : index
    %180 = vector.load %arg9[%c8_42, %c8_43] : memref<16x32xf32, #tpu.memory_space<vmem>>, vector<8x8xf32>
    tpu.vector_store %arg9[%c8_42, %c8_43], %179 {strides = array<i32>} : memref<16x32xf32, #tpu.memory_space<vmem>>, vector<8x8xf32>,
    %181 = vector.extract_strided_slice %21 {offsets = [8, 8], sizes = [8, 4], strides = [1, 1]} : vector<16x16xf32> to vector<8x4xf32>
    %182 = vector.extract_strided_slice %24 {offsets = [8, 8], sizes = [8, 4], strides = [1, 1]} : vector<16x16xf32> to vector<8x4xf32>
    %183 = tpu.concatenate %181, %182 in 1 : vector<8x4xf32>, vector<8x4xf32> -> vector<8x8xf32>
    %184 = arith.truncf %183 : vector<8x8xf32> to vector<8x8xbf16>
    %185 = vector.extract_strided_slice %27 {offsets = [8, 8], sizes = [8, 4], strides = [1, 1]} : vector<16x16xf32> to vector<8x4xf32>
    %186 = vector.extract_strided_slice %30 {offsets = [8, 8], sizes = [8, 4], strides = [1, 1]} : vector<16x16xf32> to vector<8x4xf32>
    %187 = tpu.concatenate %185, %186 in 1 : vector<8x4xf32>, vector<8x4xf32> -> vector<8x8xf32>
    %188 = arith.truncf %187 : vector<8x8xf32> to vector<8x8xbf16>
    %cst_44 = arith.constant dense<0.000000e+00> : vector<8x8xf32>
    %189 = tpu.matmul %184, %188, %cst_44 {dimension_numbers = #tpu.dot_dimension_numbers<[1], [1], [0], [0], [0, 0, 1, 0], [], []>} : vector<8x8xbf16>, vector<8x8xbf16>, vector<8x8xf32> -> vector<8x8xf32>
    %190 = arith.addf %189, %5 : vector<8x8xf32>
    %cst_45 = arith.constant dense<0xFF800000> : vector<8xf32>
    %191 = vector.multi_reduction <maximumf>, %190, %cst_45 [1] : vector<8x8xf32> to vector<8xf32>
    %192 = vector.shape_cast %191 : vector<8xf32> to vector<8x1xf32>
    %193 = vector.broadcast %192 : vector<8x1xf32> to vector<8x8xf32>
    %194 = arith.subf %190, %193 : vector<8x8xf32>
    %195 = math.exp %194 : vector<8x8xf32>
    %cst_46 = arith.constant dense<0.000000e+00> : vector<8xf32>
    %196 = vector.multi_reduction <add>, %195, %cst_46 [1] : vector<8x8xf32> to vector<8xf32>
    %197 = vector.shape_cast %196 : vector<8xf32> to vector<8x1xf32>
    %198 = tpu.reciprocal %197 {approx = true} : vector<8x1xf32> -> vector<8x1xf32>
    %199 = vector.broadcast %198 : vector<8x1xf32> to vector<8x8xf32>
    %200 = arith.mulf %195, %199 : vector<8x8xf32>
    %201 = vector.extract_strided_slice %16 {offsets = [8, 16], sizes = [8, 8], strides = [1, 1]} : vector<16x32xf32> to vector<8x8xf32>
    %202 = arith.truncf %201 : vector<8x8xf32> to vector<8x8xbf16>
    %203 = arith.truncf %200 : vector<8x8xf32> to vector<8x8xbf16>
    %cst_47 = arith.constant dense<0.000000e+00> : vector<8x8xf32>
    %204 = tpu.matmul %203, %202, %cst_47 {dimension_numbers = #tpu.dot_dimension_numbers<[1], [0], [0], [1], [0, 0, 1, 1], [], []>} : vector<8x8xbf16>, vector<8x8xbf16>, vector<8x8xf32> -> vector<8x8xf32>
    %c8_48 = arith.constant 8 : index
    %c16_49 = arith.constant 16 : index
    %205 = vector.load %arg9[%c8_48, %c16_49] : memref<16x32xf32, #tpu.memory_space<vmem>>, vector<8x8xf32>
    tpu.vector_store %arg9[%c8_48, %c16_49], %204 {strides = array<i32>} : memref<16x32xf32, #tpu.memory_space<vmem>>, vector<8x8xf32>,
    %206 = vector.extract_strided_slice %21 {offsets = [8, 12], sizes = [8, 4], strides = [1, 1]} : vector<16x16xf32> to vector<8x4xf32>
    %207 = vector.extract_strided_slice %24 {offsets = [8, 12], sizes = [8, 4], strides = [1, 1]} : vector<16x16xf32> to vector<8x4xf32>
    %208 = tpu.concatenate %206, %207 in 1 : vector<8x4xf32>, vector<8x4xf32> -> vector<8x8xf32>
    %209 = arith.truncf %208 : vector<8x8xf32> to vector<8x8xbf16>
    %210 = vector.extract_strided_slice %27 {offsets = [8, 12], sizes = [8, 4], strides = [1, 1]} : vector<16x16xf32> to vector<8x4xf32>
    %211 = vector.extract_strided_slice %30 {offsets = [8, 12], sizes = [8, 4], strides = [1, 1]} : vector<16x16xf32> to vector<8x4xf32>
    %212 = tpu.concatenate %210, %211 in 1 : vector<8x4xf32>, vector<8x4xf32> -> vector<8x8xf32>
    %213 = arith.truncf %212 : vector<8x8xf32> to vector<8x8xbf16>
    %cst_50 = arith.constant dense<0.000000e+00> : vector<8x8xf32>
    %214 = tpu.matmul %209, %213, %cst_50 {dimension_numbers = #tpu.dot_dimension_numbers<[1], [1], [0], [0], [0, 0, 1, 0], [], []>} : vector<8x8xbf16>, vector<8x8xbf16>, vector<8x8xf32> -> vector<8x8xf32>
    %215 = arith.addf %214, %5 : vector<8x8xf32>
    %cst_51 = arith.constant dense<0xFF800000> : vector<8xf32>
    %216 = vector.multi_reduction <maximumf>, %215, %cst_51 [1] : vector<8x8xf32> to vector<8xf32>
    %217 = vector.shape_cast %216 : vector<8xf32> to vector<8x1xf32>
    %218 = vector.broadcast %217 : vector<8x1xf32> to vector<8x8xf32>
    %219 = arith.subf %215, %218 : vector<8x8xf32>
    %220 = math.exp %219 : vector<8x8xf32>
    %cst_52 = arith.constant dense<0.000000e+00> : vector<8xf32>
    %221 = vector.multi_reduction <add>, %220, %cst_52 [1] : vector<8x8xf32> to vector<8xf32>
    %222 = vector.shape_cast %221 : vector<8xf32> to vector<8x1xf32>
    %223 = tpu.reciprocal %222 {approx = true} : vector<8x1xf32> -> vector<8x1xf32>
    %224 = vector.broadcast %223 : vector<8x1xf32> to vector<8x8xf32>
    %225 = arith.mulf %220, %224 : vector<8x8xf32>
    %226 = vector.extract_strided_slice %16 {offsets = [8, 24], sizes = [8, 8], strides = [1, 1]} : vector<16x32xf32> to vector<8x8xf32>
    %227 = arith.truncf %226 : vector<8x8xf32> to vector<8x8xbf16>
    %228 = arith.truncf %225 : vector<8x8xf32> to vector<8x8xbf16>
    %cst_53 = arith.constant dense<0.000000e+00> : vector<8x8xf32>
    %229 = tpu.matmul %228, %227, %cst_53 {dimension_numbers = #tpu.dot_dimension_numbers<[1], [0], [0], [1], [0, 0, 1, 1], [], []>} : vector<8x8xbf16>, vector<8x8xbf16>, vector<8x8xf32> -> vector<8x8xf32>
    %c8_54 = arith.constant 8 : index
    %c24_55 = arith.constant 24 : index
    %230 = vector.load %arg9[%c8_54, %c24_55] : memref<16x32xf32, #tpu.memory_space<vmem>>, vector<8x8xf32>
    tpu.vector_store %arg9[%c8_54, %c24_55], %229 {strides = array<i32>} : memref<16x32xf32, #tpu.memory_space<vmem>>, vector<8x8xf32>,
    %c0_56 = arith.constant 0 : index
    %c0_57 = arith.constant 0 : index
    %231 = vector.load %arg9[%c0_56, %c0_57] : memref<16x32xf32, #tpu.memory_space<vmem>>, vector<16x32xf32>
    %232 = arith.truncf %231 : vector<16x32xf32> to vector<16x32xbf16>
    %c0_58 = arith.constant 0 : index
    %c0_59 = arith.constant 0 : index
    %233 = vector.load %arg4[%c0_58, %c0_59] : memref<32x32xbf16, #tpu.memory_space<vmem>>, vector<32x32xbf16>
    %cst_60 = arith.constant dense<0.000000e+00> : vector<16x32xf32>
    %234 = tpu.matmul %232, %233, %cst_60 {dimension_numbers = #tpu.dot_dimension_numbers<[1], [0], [0], [1], [0, 0, 1, 1], [], []>} : vector<16x32xbf16>, vector<32x32xbf16>, vector<16x32xf32> -> vector<16x32xf32>
    %c0_61 = arith.constant 0 : index
    %c0_62 = arith.constant 0 : index
    %235 = vector.load %arg5[%c0_61, %c0_62] : memref<1x32xf32, #tpu.memory_space<vmem>>, vector<1x32xf32>
    %236 = vector.broadcast %235 : vector<1x32xf32> to vector<16x32xf32>
    %237 = arith.addf %234, %236 : vector<16x32xf32>
    %c0_63 = arith.constant 0 : index
    %c0_64 = arith.constant 0 : index
    %238 = vector.load %arg8[%c0_63, %c0_64] : memref<16x32xf32, #tpu.memory_space<vmem>>, vector<16x32xf32>
    tpu.vector_store %arg8[%c0_63, %c0_64], %237 {strides = array<i32>} : memref<16x32xf32, #tpu.memory_space<vmem>>, vector<16x32xf32>,
    return
  }
  func.func @transform_0(%arg0: i32) -> (i32, i32) {
    %c0_i32 = arith.constant 0 : i32
    %c0_i32_0 = arith.constant 0 : i32
    return %arg0, %c0_i32 : i32, i32
  }
  func.func @transform_1(%arg0: i32) -> (i32, i32) {
    %c0_i32 = arith.constant 0 : i32
    %c0_i32_0 = arith.constant 0 : i32
    %c0_i32_1 = arith.constant 0 : i32
    return %c0_i32, %c0_i32_0 : i32, i32
  }
  func.func @transform_2(%arg0: i32) -> (i32, i32) {
    %c0_i32 = arith.constant 0 : i32
    %c0_i32_0 = arith.constant 0 : i32
    %c0_i32_1 = arith.constant 0 : i32
    return %c0_i32, %c0_i32_0 : i32, i32
  }
  func.func @transform_3(%arg0: i32) -> (i32, i32) {
    %c0_i32 = arith.constant 0 : i32
    %c0_i32_0 = arith.constant 0 : i32
    %c0_i32_1 = arith.constant 0 : i32
    return %c0_i32, %c0_i32_0 : i32, i32
  }
  func.func @transform_4(%arg0: i32) -> (i32, i32) {
    %c0_i32 = arith.constant 0 : i32
    %c0_i32_0 = arith.constant 0 : i32
    %c0_i32_1 = arith.constant 0 : i32
    return %c0_i32, %c0_i32_0 : i32, i32
  }
  func.func @transform_5(%arg0: i32) -> (i32, i32) {
    %c0_i32 = arith.constant 0 : i32
    %c0_i32_0 = arith.constant 0 : i32
    %c0_i32_1 = arith.constant 0 : i32
    return %c0_i32, %c0_i32_0 : i32, i32
  }
  func.func @transform_6(%arg0: i32) -> (i32, i32) {
    %c0_i32 = arith.constant 0 : i32
    %c0_i32_0 = arith.constant 0 : i32
    %c0_i32_1 = arith.constant 0 : i32
    return %c0_i32, %c0_i32_0 : i32, i32
  }
  func.func @transform_7(%arg0: i32) -> (i32, i32) {
    %c0_i32 = arith.constant 0 : i32
    %c0_i32_0 = arith.constant 0 : i32
    return %arg0, %c0_i32 : i32, i32
  }
}

</mosaic_0001>

<llo_original>
// kernel: tpu_custom_call.1
$region0: #{tpu_custom_call.1}
  #allocation0 [shape = 'u32[]', space=smem, size = 0x4, offset = 0x4, fixed_abs, tag = 'smem constant byte address 0x4 - core index']
  #allocation1 [shape = 'u32[144,128]{1,0:T(1,128)}', space=vmem, size = 0x12000, scoped, tag = 'internal scratch']
  #allocation2 [shape = 'f32[16,32]{1,0:T(8,128)}', space=vmem, size = 0x2000, scoped, tag = 'scratch operand']
  %s0 = inlined_call_operand.hbm [shape: bf16[16,32], index: 0, kind: input, shape index: {}]
  %s1 = inlined_call_operand.hbm [shape: bf16[32,96], index: 1, kind: input, shape index: {}]
  %s2 = inlined_call_operand.vmem [shape: f32[1,96], index: 2, kind: input, shape index: {}]
  %s3 = inlined_call_operand.hbm [shape: bf16[32,32], index: 3, kind: input, shape index: {}]
  %s4 = inlined_call_operand.vmem [shape: f32[1,32], index: 4, kind: input, shape index: {}]
  %s5 = inlined_call_operand.vmem [shape: f32[16,16], index: 5, kind: input, shape index: {}]
  %s6 = inlined_call_operand.hbm [shape: f32[16,16], index: 6, kind: input, shape index: {}]
  %s7 = inlined_call_operand.hbm [shape: f32[16,32], index: 7, kind: output, shape index: {}]
  %s8 = sld [smem:[#allocation0]]
  $region54: #{tpu_custom_call.1} parent=0
    _
  %s10 = ssub.s32 1, %s8
  %s11 = scalar_select 0, %s10, %s8
  $region1: #{tpu_custom_call.1} parent=0
    #allocation3 [shape = 'u8[4096]{0}', space=vmem, size = 0x1000, scoped, tag = 'input window, operand 0, single buffered']
    #allocation4 [shape = 's32[1]{0}', space=sflag, size = 0x4, scoped, tag = 'scoped memory for tpu_custom_call.1']
    #allocation5 [shape = 's32[1]{0}', space=sflag, size = 0x4, scoped, tag = 'scoped memory for tpu_custom_call.1']
    #allocation6 [shape = 'u8[8192]{0}', space=vmem, size = 0x2000, scoped, tag = 'input window, operand 1, single buffered']
    #allocation7 [shape = 's32[1]{0}', space=sflag, size = 0x4, scoped, tag = 'scoped memory for tpu_custom_call.1']
    #allocation8 [shape = 'u8[8192]{0}', space=vmem, size = 0x2000, scoped, tag = 'input window, operand 3, single buffered']
    #allocation9 [shape = 'u8[8192]{0}', space=vmem, size = 0x2000, scoped, tag = 'input window, operand 6, single buffered']
    #allocation10 [shape = 's32[1]{0}', space=sflag, size = 0x4, scoped, tag = 'scoped memory for tpu_custom_call.1']
    #allocation11 [shape = 'u8[8192]{0}', space=vmem, size = 0x2000, scoped, tag = 'output window, operand 0, single buffered']
    %12 = vsyncpa [#allocation4], 0
    %13 = vsyncpa [#allocation7], 0
    %14 = vsyncpa [#allocation10], 0
    %15 = vsyncpa [#allocation5], 0
    // Predicated region
    $region2: #{tpu_custom_call.1} parent=1 // pred_check
      _
    $region3: #{tpu_custom_call.1} parent=1 // pred_check_branch
      %17 = sbr.rel (0) target = $region5
    $region4: #{tpu_custom_call.1} parent=1 // pred_region
      %s19 = ssub.s32 128, 128
      %20 = vsyncadd [#allocation4], %s19
      %s21 = sshll.u32 [#allocation3], 4
      %s22 = int_to_ptr.vmem [resolvable:$true] %s21
      %27 = dma.hbm_to_vmem [thread:$0]  %s0, 128, %s22, [#allocation4], 64, 64, 4
    $region5: #{tpu_custom_call.1} parent=1 // pred_fallthru
      _
    // Predicated region
    $region6: #{tpu_custom_call.1} parent=1 // pred_check
      _
    $region7: #{tpu_custom_call.1} parent=1 // pred_check_branch
      %29 = sbr.rel (0) target = $region9
    $region8: #{tpu_custom_call.1} parent=1 // pred_region
      %s31 = ssub.s32 256, 256
      %32 = vsyncadd [#allocation7], %s31
      %s33 = sshll.u32 [#allocation6], 4
      %s34 = int_to_ptr.vmem [resolvable:$true] %s33
      %39 = dma.hbm_to_vmem [thread:$0]  %s1, 256, %s34, [#allocation7], 64, 64, 4
    $region9: #{tpu_custom_call.1} parent=1 // pred_fallthru
      _
    // Predicated region
    $region10: #{tpu_custom_call.1} parent=1 // pred_check
      _
    $region11: #{tpu_custom_call.1} parent=1 // pred_check_branch
      %41 = sbr.rel (0) target = $region13
    $region12: #{tpu_custom_call.1} parent=1 // pred_region
      _
    $region13: #{tpu_custom_call.1} parent=1 // pred_fallthru
      _
    // Predicated region
    $region14: #{tpu_custom_call.1} parent=1 // pred_check
      _
    $region15: #{tpu_custom_call.1} parent=1 // pred_check_branch
      %43 = sbr.rel (0) target = $region17
    $region16: #{tpu_custom_call.1} parent=1 // pred_region
      %s45 = ssub.s32 256, 256
      %46 = vsyncadd [#allocation7], %s45
      %s47 = sshll.u32 [#allocation8], 4
      %s48 = int_to_ptr.vmem [resolvable:$true] %s47
      %53 = dma.hbm_to_vmem [thread:$0]  %s3, 256, %s48, [#allocation7], 64, 64, 4
    $region17: #{tpu_custom_call.1} parent=1 // pred_fallthru
      _
    // Predicated region
    $region18: #{tpu_custom_call.1} parent=1 // pred_check
      _
    $region19: #{tpu_custom_call.1} parent=1 // pred_check_branch
      %55 = sbr.rel (0) target = $region21
    $region20: #{tpu_custom_call.1} parent=1 // pred_region
      _
    $region21: #{tpu_custom_call.1} parent=1 // pred_fallthru
      _
    // Predicated region
    $region22: #{tpu_custom_call.1} parent=1 // pred_check
      _
    $region23: #{tpu_custom_call.1} parent=1 // pred_check_branch
      %57 = sbr.rel (0) target = $region25
    $region24: #{tpu_custom_call.1} parent=1 // pred_region
      _
    $region25: #{tpu_custom_call.1} parent=1 // pred_fallthru
      _
    // Predicated region
    $region26: #{tpu_custom_call.1} parent=1 // pred_check
      _
    $region27: #{tpu_custom_call.1} parent=1 // pred_check_branch
      %59 = sbr.rel (0) target = $region29
    $region28: #{tpu_custom_call.1} parent=1 // pred_region
      %s61 = ssub.s32 256, 256
      %62 = vsyncadd [#allocation10], %s61
      %s63 = sshll.u32 [#allocation9], 4
      %s64 = int_to_ptr.vmem [resolvable:$true] %s63
      %69 = dma.hbm_to_vmem [thread:$0]  %s6, 256, %s64, [#allocation10], 128, 128, 8
    $region29: #{tpu_custom_call.1} parent=1 // pred_fallthru
      _
    // Predicated region
    $region30: #{tpu_custom_call.1} parent=1 // pred_check
      _
    $region31: #{tpu_custom_call.1} parent=1 // pred_check_branch
      %71 = sbr.rel (0) target = $region33
    $region32: #{tpu_custom_call.1} parent=1 // pred_region
      %72 = dma.done [#allocation4], 128
    $region33: #{tpu_custom_call.1} parent=1 // pred_fallthru
      _
    // Predicated region
    $region34: #{tpu_custom_call.1} parent=1 // pred_check
      _
    $region35: #{tpu_custom_call.1} parent=1 // pred_check_branch
      %74 = sbr.rel (0) target = $region37
    $region36: #{tpu_custom_call.1} parent=1 // pred_region
      %75 = dma.done [#allocation7], 256
    $region37: #{tpu_custom_call.1} parent=1 // pred_fallthru
      _
    // Predicated region
    $region38: #{tpu_custom_call.1} parent=1 // pred_check
      _
    $region39: #{tpu_custom_call.1} parent=1 // pred_check_branch
      %77 = sbr.rel (0) target = $region41
    $region40: #{tpu_custom_call.1} parent=1 // pred_region
      %78 = dma.done [#allocation7], 256
    $region41: #{tpu_custom_call.1} parent=1 // pred_fallthru
      _
    // Predicated region
    $region42: #{tpu_custom_call.1} parent=1 // pred_check
      _
    $region43: #{tpu_custom_call.1} parent=1 // pred_check_branch
      %80 = sbr.rel (0) target = $region45
    $region44: #{tpu_custom_call.1} parent=1 // pred_region
      %81 = dma.done [#allocation10], 256
    $region45: #{tpu_custom_call.1} parent=1 // pred_fallthru
      _
    %v83 = vlaneseq
    %v84 = vshrl.u32 %v83, 7
    %v85 = vlaneseq
    %v86 = vand.u32 %v85, 127
    %vm87 = vcmp.le.s32.totalorder %v86, %v84
    %v88 = vsel %vm87, 0.0, -1e+09
    %v89 = vld [vmem:[#allocation3] sm:$0xf]
    %v90 = vld [vmem:[#allocation3 + $0x4] sm:$0xf]
    %v91 = vld [vmem:[#allocation6] sm:$0xf]
    %v92 = vld [vmem:[#allocation6 + $0x4] sm:$0xf]
    %v93 = vld [vmem:[#allocation6 + $0x8] sm:$0xf]
    %v94 = vld [vmem:[#allocation6 + $0xc] sm:$0xf]
    %v95 = vld [vmem:[%s2] sm:$0x1]
    %v97 = vlaneseq
    %v98 = vshrl.u32 %v97, 7
    %v99 = vsub.s32 0, %v98
    %v100 = vrot.slane %v95, %v99
    %v104 = vunpack.c.l.b16 %v89
    %v105 = vunpack.c.l.b16 %v90
    %v106 = vpack.c.b16 %v105, %v104
    %v111 = vunpack.c.l.b16 %v91
    %v112 = vunpack.c.l.b16 %v92
    %v113 = vunpack.c.l.b16 %v93
    %v114 = vunpack.c.l.b16 %v94
    %v115 = vpack.c.b16 %v112, %v111
    %v116 = vpack.c.b16 %v114, %v113
    %vm119 = vcmask 261120
    %v121 = vsel %vm119, %v106, 0
    %123 = vmatprep.subr.bf16.mxu0 0
    %124 = vmatpush1.bf16.msra.mxu0 %v115
    %125 = vmatprep.subr.bf16.mxu0 0
    %126 = vmatpush1.bf16.msra.mxu0 %v116
    %127 = vmatprep.subr.bf16.mxu0 0
    %128 = vmatpush1.bf16.msra.mxu0 0
    %129 = vmatprep.subr.bf16.mxu0 0
    %130 = vmatpush1.bf16.msra.mxu0 0
    %131 = vmatprep.subr.bf16.mxu0 0
    %132 = vmatpush1.bf16.msra.mxu0 0
    %133 = vmatprep.subr.bf16.mxu0 0
    %134 = vmatpush1.bf16.msra.mxu0 0
    %135 = vmatprep.subr.bf16.mxu0 0
    %136 = vmatpush1.bf16.msra.mxu0 0
    %137 = vmatprep.subr.bf16.mxu0 0
    %138 = vmatpush1.bf16.msra.mxu0 0
    %139 = vmatprep.subr.bf16.mxu0 0
    %140 = vmatpush1.bf16.msra.mxu0 0
    %141 = vmatprep.subr.bf16.mxu0 0
    %142 = vmatpush1.bf16.msra.mxu0 0
    %143 = vmatprep.subr.bf16.mxu0 0
    %144 = vmatpush1.bf16.msra.mxu0 0
    %145 = vmatprep.subr.bf16.mxu0 0
    %146 = vmatpush1.bf16.msra.mxu0 0
    %147 = vmatprep.subr.bf16.mxu0 0
    %148 = vmatpush1.bf16.msra.mxu0 0
    %149 = vmatprep.subr.bf16.mxu0 0
    %150 = vmatpush1.bf16.msra.mxu0 0
    %151 = vmatprep.subr.bf16.mxu0 0
    %152 = vmatpush1.bf16.msra.mxu0 0
    %153 = vmatprep.subr.bf16.mxu0 0
    %154 = vmatpush1.bf16.msra.mxu0 0
    %155 = vmatprep.mubr.bf16.mxu0 0
    %156 = vmatmul.mubr.bf16.gmra.mrb[0].mxu0 %v121
    %v157 = vpop.f32.mrb[0].mxu0
    %v158 = vadd.f32 %v100, %v157
    %v159 = vpop.f32.mrb[0].mxu0
    %v160 = vpop.f32.mrb[0].mxu0
    %v161 = vadd.f32 %v100, %v160
    %v162 = vpop.f32.mrb[0].mxu0
    %163 = vdwg.mxu0
    %v164 = vld [vmem:[%s5] sm:$0xff]
    %v165 = vld [vmem:[%s5 + $0x8] sm:$0xff]
    %v166 = vld [vmem:[#allocation9] sm:$0xff]
    %v167 = vld [vmem:[#allocation9 + $0x8] sm:$0xff]
    %v168 = vmul.f32 %v158, %v164
    %v169 = vmul.f32 %v161, %v165
    %172 = vrot.lane.b32.xlu0 %v166, 16
    %v173 = vpop.permute.xlu0 %172
    %174 = vrot.lane.b32.xlu0 %v167, 16
    %v175 = vpop.permute.xlu0 %174
    %v178 = vmul.f32 %v158, %v173
    %v179 = vmul.f32 %v161, %v175
    %182 = vrot.lane.b32.xlu0 %v178, 112
    %v183 = vpop.permute.xlu0 %182
    %184 = vrot.lane.b32.xlu0 %v179, 112
    %v185 = vpop.permute.xlu0 %184
    %v188 = vsub.f32 %v168, %v183
    %v189 = vsub.f32 %v169, %v185
    %192 = vrot.lane.b32.xlu0 %v164, 16
    %v193 = vpop.permute.xlu0 %192
    %194 = vrot.lane.b32.xlu0 %v165, 16
    %v195 = vpop.permute.xlu0 %194
    %v198 = vmul.f32 %v158, %v193
    %v199 = vmul.f32 %v161, %v195
    %v200 = vmul.f32 %v158, %v166
    %v201 = vmul.f32 %v161, %v167
    %204 = vrot.lane.b32.xlu0 %v200, 16
    %v205 = vpop.permute.xlu0 %204
    %206 = vrot.lane.b32.xlu0 %v201, 16
    %v207 = vpop.permute.xlu0 %206
    %v210 = vadd.f32 %v198, %v205
    %v211 = vadd.f32 %v199, %v207
    %212 = vrot.lane.b32.xlu0 %v164, 32
    %v213 = vpop.permute.xlu0 %212
    %214 = vrot.lane.b32.xlu0 %v165, 32
    %v215 = vpop.permute.xlu0 %214
    %v218 = vmul.f32 %v158, %v213
    %v219 = vmul.f32 %v161, %v215
    %220 = vrot.lane.b32.xlu0 %v166, 48
    %v221 = vpop.permute.xlu0 %220
    %222 = vrot.lane.b32.xlu0 %v167, 48
    %v223 = vpop.permute.xlu0 %222
    %v226 = vmul.f32 %v158, %v221
    %v227 = vmul.f32 %v161, %v223
    %230 = vrot.lane.b32.xlu0 %v226, 112
    %v231 = vpop.permute.xlu0 %230
    %232 = vrot.lane.b32.xlu0 %v227, 112
    %v233 = vpop.permute.xlu0 %232
    %v236 = vsub.f32 %v218, %v231
    %v237 = vsub.f32 %v219, %v233
    %238 = vrot.lane.b32.xlu0 %v164, 48
    %v239 = vpop.permute.xlu0 %238
    %240 = vrot.lane.b32.xlu0 %v165, 48
    %v241 = vpop.permute.xlu0 %240
    %v244 = vmul.f32 %v158, %v239
    %v245 = vmul.f32 %v161, %v241
    %246 = vrot.lane.b32.xlu0 %v166, 32
    %v247 = vpop.permute.xlu0 %246
    %248 = vrot.lane.b32.xlu0 %v167, 32
    %v249 = vpop.permute.xlu0 %248
    %v252 = vmul.f32 %v158, %v247
    %v253 = vmul.f32 %v161, %v249
    %256 = vrot.lane.b32.xlu0 %v252, 16
    %v257 = vpop.permute.xlu0 %256
    %258 = vrot.lane.b32.xlu0 %v253, 16
    %v259 = vpop.permute.xlu0 %258
    %v262 = vadd.f32 %v244, %v257
    %v263 = vadd.f32 %v245, %v259
    %265 = vrot.lane.b32.xlu0 %v210, 116
    %v266 = vpop.permute.xlu0 %265
    %vm268 = vcmask 31744
    %v269 = vsel %vm268, %v188, %v266
    %v270 = vpack.c.bf16 %v269, %v269
    %272 = vrot.lane.b32.xlu0 %v236, 96
    %v273 = vpop.permute.xlu0 %272
    %276 = vrot.lane.b32.xlu0 %v262, 84
    %v277 = vpop.permute.xlu0 %276
    %v279 = vsel %vm268, %v273, %v277
    %v280 = vpack.c.bf16 %v279, %v279
    %vm281 = vcmask 64512
    %v283 = vsel %vm281, %v270, 0
    %v286 = vsel %vm281, %v280, 0
    %288 = vmatprep.subr.bf16.mxu0 0
    %289 = vmatpush1.bf16.xpose.msra.mxu0 %v286
    %290 = vmatprep.subr.bf16.mxu0 0
    %291 = vmatpush1.bf16.xpose.msra.mxu0 0
    %292 = vmatprep.subr.bf16.mxu0 0
    %293 = vmatpush1.bf16.xpose.msra.mxu0 0
    %294 = vmatprep.subr.bf16.mxu0 0
    %295 = vmatpush1.bf16.xpose.msra.mxu0 0
    %296 = vmatprep.subr.bf16.mxu0 0
    %297 = vmatpush1.bf16.xpose.msra.mxu0 0
    %298 = vmatprep.subr.bf16.mxu0 0
    %299 = vmatpush1.bf16.xpose.msra.mxu0 0
    %300 = vmatprep.subr.bf16.mxu0 0
    %301 = vmatpush1.bf16.xpose.msra.mxu0 0
    %302 = vmatprep.subr.bf16.mxu0 0
    %303 = vmatpush1.bf16.xpose.msra.mxu0 0
    %304 = vmatprep.subr.bf16.mxu0 0
    %305 = vmatpush1.bf16.xpose.msra.mxu0 0
    %306 = vmatprep.subr.bf16.mxu0 0
    %307 = vmatpush1.bf16.xpose.msra.mxu0 0
    %308 = vmatprep.subr.bf16.mxu0 0
    %309 = vmatpush1.bf16.xpose.msra.mxu0 0
    %310 = vmatprep.subr.bf16.mxu0 0
    %311 = vmatpush1.bf16.xpose.msra.mxu0 0
    %312 = vmatprep.subr.bf16.mxu0 0
    %313 = vmatpush1.bf16.xpose.msra.mxu0 0
    %314 = vmatprep.subr.bf16.mxu0 0
    %315 = vmatpush1.bf16.xpose.msra.mxu0 0
    %316 = vmatprep.subr.bf16.mxu0 0
    %317 = vmatpush1.bf16.xpose.msra.mxu0 0
    %318 = vmatprep.subr.bf16.mxu0 0
    %319 = vmatpush1.bf16.xpose.msra.mxu0 0
    %320 = vmatprep.mubr.bf16.mxu0 0
    %321 = vmatmul.mubr.bf16.gmra.mrb[0].mxu0 %v283
    %v322 = vpop.f32.mrb[0].mxu0
    %v323 = vadd.f32 %v88, %v322
    %v324 = vpop.f32.mrb[0].mxu0
    %v325 = vpop.f32.mrb[0].mxu0
    %v326 = vpop.f32.mrb[0].mxu0
    %327 = vdwg.mxu0
    %v328 = vsel %vm281, %v323, -inf
    %329 = vmax.xlane.f32.xlu0 %v328
    %v330 = vpop.xlane.xlu0 %329
    %v331 = vsub.f32 %v323, %v330
    %v332 = vmul.f32 %v331, 1.442695
    %v333 = vpow.pop %v332
    %v334 = vsel %vm281, %v333, 0.0
    %335 = vadd.xlane.f32.xlu0 %v334
    %v336 = vpop.xlane.xlu0 %335
    %v337 = vrcp.pop %v336
    %v338 = vmul.f32 %v333, %v337
    %v339 = vpack.c.bf16 %v158, %v158
    %v340 = vpack.c.bf16 %v338, %v338
    %342 = vrot.lane.b32.xlu0 %v339, 64
    %v343 = vpop.permute.xlu0 %342
    %v345 = vsel %vm281, %v340, 0
    %vm347 = vcmask 1043456
    %v349 = vsel %vm347, %v343, 0
    %351 = vmatprep.subr.bf16.mxu0 0
    %352 = vmatpush1.bf16.msra.mxu0 %v349
    %353 = vmatprep.subr.bf16.mxu0 0
    %354 = vmatpush1.bf16.msra.mxu0 0
    %355 = vmatprep.subr.bf16.mxu0 0
    %356 = vmatpush1.bf16.msra.mxu0 0
    %357 = vmatprep.subr.bf16.mxu0 0
    %358 = vmatpush1.bf16.msra.mxu0 0
    %359 = vmatprep.subr.bf16.mxu0 0
    %360 = vmatpush1.bf16.msra.mxu0 0
    %361 = vmatprep.subr.bf16.mxu0 0
    %362 = vmatpush1.bf16.msra.mxu0 0
    %363 = vmatprep.subr.bf16.mxu0 0
    %364 = vmatpush1.bf16.msra.mxu0 0
    %365 = vmatprep.subr.bf16.mxu0 0
    %366 = vmatpush1.bf16.msra.mxu0 0
    %367 = vmatprep.subr.bf16.mxu0 0
    %368 = vmatpush1.bf16.msra.mxu0 0
    %369 = vmatprep.subr.bf16.mxu0 0
    %370 = vmatpush1.bf16.msra.mxu0 0
    %371 = vmatprep.subr.bf16.mxu0 0
    %372 = vmatpush1.bf16.msra.mxu0 0
    %373 = vmatprep.subr.bf16.mxu0 0
    %374 = vmatpush1.bf16.msra.mxu0 0
    %375 = vmatprep.subr.bf16.mxu0 0
    %376 = vmatpush1.bf16.msra.mxu0 0
    %377 = vmatprep.subr.bf16.mxu0 0
    %378 = vmatpush1.bf16.msra.mxu0 0
    %379 = vmatprep.subr.bf16.mxu0 0
    %380 = vmatpush1.bf16.msra.mxu0 0
    %381 = vmatprep.subr.bf16.mxu0 0
    %382 = vmatpush1.bf16.msra.mxu0 0
    %383 = vmatprep.mubr.bf16.mxu0 0
    %384 = vmatmul.mubr.bf16.gmra.mrb[0].mxu0 %v345
    %v385 = vpop.f32.mrb[0].mxu0
    %v386 = vadd.f32 0.0, %v385
    %v387 = vpop.f32.mrb[0].mxu0
    %v388 = vpop.f32.mrb[0].mxu0
    %v389 = vpop.f32.mrb[0].mxu0
    %390 = vdwg.mxu0
    %391 = vst.msk [vmem:[#allocation2] sm:$0xff] %vm281, %v386
    %393 = vrot.lane.b32.xlu0 %v188, 124
    %v394 = vpop.permute.xlu0 %393
    %396 = vrot.lane.b32.xlu0 %v210, 112
    %v397 = vpop.permute.xlu0 %396
    %v399 = vsel %vm268, %v394, %v397
    %v400 = vpack.c.bf16 %v399, %v399
    %401 = vrot.lane.b32.xlu0 %v236, 92
    %v402 = vpop.permute.xlu0 %401
    %404 = vrot.lane.b32.xlu0 %v262, 80
    %v405 = vpop.permute.xlu0 %404
    %v407 = vsel %vm268, %v402, %v405
    %v408 = vpack.c.bf16 %v407, %v407
    %v410 = vsel %vm281, %v400, 0
    %v413 = vsel %vm281, %v408, 0
    %415 = vmatprep.subr.bf16.mxu0 0
    %416 = vmatpush1.bf16.xpose.msra.mxu0 %v413
    %417 = vmatprep.subr.bf16.mxu0 0
    %418 = vmatpush1.bf16.xpose.msra.mxu0 0
    %419 = vmatprep.subr.bf16.mxu0 0
    %420 = vmatpush1.bf16.xpose.msra.mxu0 0
    %421 = vmatprep.subr.bf16.mxu0 0
    %422 = vmatpush1.bf16.xpose.msra.mxu0 0
    %423 = vmatprep.subr.bf16.mxu0 0
    %424 = vmatpush1.bf16.xpose.msra.mxu0 0
    %425 = vmatprep.subr.bf16.mxu0 0
    %426 = vmatpush1.bf16.xpose.msra.mxu0 0
    %427 = vmatprep.subr.bf16.mxu0 0
    %428 = vmatpush1.bf16.xpose.msra.mxu0 0
    %429 = vmatprep.subr.bf16.mxu0 0
    %430 = vmatpush1.bf16.xpose.msra.mxu0 0
    %431 = vmatprep.subr.bf16.mxu0 0
    %432 = vmatpush1.bf16.xpose.msra.mxu0 0
    %433 = vmatprep.subr.bf16.mxu0 0
    %434 = vmatpush1.bf16.xpose.msra.mxu0 0
    %435 = vmatprep.subr.bf16.mxu0 0
    %436 = vmatpush1.bf16.xpose.msra.mxu0 0
    %437 = vmatprep.subr.bf16.mxu0 0
    %438 = vmatpush1.bf16.xpose.msra.mxu0 0
    %439 = vmatprep.subr.bf16.mxu0 0
    %440 = vmatpush1.bf16.xpose.msra.mxu0 0
    %441 = vmatprep.subr.bf16.mxu0 0
    %442 = vmatpush1.bf16.xpose.msra.mxu0 0
    %443 = vmatprep.subr.bf16.mxu0 0
    %444 = vmatpush1.bf16.xpose.msra.mxu0 0
    %445 = vmatprep.subr.bf16.mxu0 0
    %446 = vmatpush1.bf16.xpose.msra.mxu0 0
    %447 = vmatprep.mubr.bf16.mxu0 0
    %448 = vmatmul.mubr.bf16.gmra.mrb[0].mxu0 %v410
    %v449 = vpop.f32.mrb[0].mxu0
    %v450 = vadd.f32 %v88, %v449
    %v451 = vpop.f32.mrb[0].mxu0
    %v452 = vpop.f32.mrb[0].mxu0
    %v453 = vpop.f32.mrb[0].mxu0
    %454 = vdwg.mxu0
    %v455 = vsel %vm281, %v450, -inf
    %456 = vmax.xlane.f32.xlu0 %v455
    %v457 = vpop.xlane.xlu0 %456
    %v458 = vsub.f32 %v450, %v457
    %v459 = vmul.f32 %v458, 1.442695
    %v460 = vpow.pop %v459
    %v461 = vsel %vm281, %v460, 0.0
    %462 = vadd.xlane.f32.xlu0 %v461
    %v463 = vpop.xlane.xlu0 %462
    %v464 = vrcp.pop %v463
    %v465 = vmul.f32 %v460, %v464
    %v466 = vpack.c.bf16 %v465, %v465
    %467 = vrot.lane.b32.xlu0 %v339, 56
    %v468 = vpop.permute.xlu0 %467
    %v470 = vsel %vm281, %v466, 0
    %v473 = vsel %vm347, %v468, 0
    %475 = vmatprep.subr.bf16.mxu0 0
    %476 = vmatpush1.bf16.msra.mxu0 %v473
    %477 = vmatprep.subr.bf16.mxu0 0
    %478 = vmatpush1.bf16.msra.mxu0 0
    %479 = vmatprep.subr.bf16.mxu0 0
    %480 = vmatpush1.bf16.msra.mxu0 0
    %481 = vmatprep.subr.bf16.mxu0 0
    %482 = vmatpush1.bf16.msra.mxu0 0
    %483 = vmatprep.subr.bf16.mxu0 0
    %484 = vmatpush1.bf16.msra.mxu0 0
    %485 = vmatprep.subr.bf16.mxu0 0
    %486 = vmatpush1.bf16.msra.mxu0 0
    %487 = vmatprep.subr.bf16.mxu0 0
    %488 = vmatpush1.bf16.msra.mxu0 0
    %489 = vmatprep.subr.bf16.mxu0 0
    %490 = vmatpush1.bf16.msra.mxu0 0
    %491 = vmatprep.subr.bf16.mxu0 0
    %492 = vmatpush1.bf16.msra.mxu0 0
    %493 = vmatprep.subr.bf16.mxu0 0
    %494 = vmatpush1.bf16.msra.mxu0 0
    %495 = vmatprep.subr.bf16.mxu0 0
    %496 = vmatpush1.bf16.msra.mxu0 0
    %497 = vmatprep.subr.bf16.mxu0 0
    %498 = vmatpush1.bf16.msra.mxu0 0
    %499 = vmatprep.subr.bf16.mxu0 0
    %500 = vmatpush1.bf16.msra.mxu0 0
    %501 = vmatprep.subr.bf16.mxu0 0
    %502 = vmatpush1.bf16.msra.mxu0 0
    %503 = vmatprep.subr.bf16.mxu0 0
    %504 = vmatpush1.bf16.msra.mxu0 0
    %505 = vmatprep.subr.bf16.mxu0 0
    %506 = vmatpush1.bf16.msra.mxu0 0
    %507 = vmatprep.mubr.bf16.mxu0 0
    %508 = vmatmul.mubr.bf16.gmra.mrb[0].mxu0 %v470
    %v509 = vpop.f32.mrb[0].mxu0
    %v510 = vadd.f32 0.0, %v509
    %v511 = vpop.f32.mrb[0].mxu0
    %v512 = vpop.f32.mrb[0].mxu0
    %v513 = vpop.f32.mrb[0].mxu0
    %514 = vdwg.mxu0
    %516 = vrot.lane.b32.xlu0 %v510, 8
    %v517 = vpop.permute.xlu0 %516
    %vm519 = vcmask 130112
    %520 = vst.msk [vmem:[#allocation2] sm:$0xff] %vm519, %v517
    %521 = vrot.lane.b32.xlu0 %v188, 120
    %v522 = vpop.permute.xlu0 %521
    %524 = vrot.lane.b32.xlu0 %v210, 108
    %v525 = vpop.permute.xlu0 %524
    %v527 = vsel %vm268, %v522, %v525
    %v528 = vpack.c.bf16 %v527, %v527
    %529 = vrot.lane.b32.xlu0 %v236, 88
    %v530 = vpop.permute.xlu0 %529
    %532 = vrot.lane.b32.xlu0 %v262, 76
    %v533 = vpop.permute.xlu0 %532
    %v535 = vsel %vm268, %v530, %v533
    %v536 = vpack.c.bf16 %v535, %v535
    %v538 = vsel %vm281, %v528, 0
    %v541 = vsel %vm281, %v536, 0
    %543 = vmatprep.subr.bf16.mxu0 0
    %544 = vmatpush1.bf16.xpose.msra.mxu0 %v541
    %545 = vmatprep.subr.bf16.mxu0 0
    %546 = vmatpush1.bf16.xpose.msra.mxu0 0
    %547 = vmatprep.subr.bf16.mxu0 0
    %548 = vmatpush1.bf16.xpose.msra.mxu0 0
    %549 = vmatprep.subr.bf16.mxu0 0
    %550 = vmatpush1.bf16.xpose.msra.mxu0 0
    %551 = vmatprep.subr.bf16.mxu0 0
    %552 = vmatpush1.bf16.xpose.msra.mxu0 0
    %553 = vmatprep.subr.bf16.mxu0 0
    %554 = vmatpush1.bf16.xpose.msra.mxu0 0
    %555 = vmatprep.subr.bf16.mxu0 0
    %556 = vmatpush1.bf16.xpose.msra.mxu0 0
    %557 = vmatprep.subr.bf16.mxu0 0
    %558 = vmatpush1.bf16.xpose.msra.mxu0 0
    %559 = vmatprep.subr.bf16.mxu0 0
    %560 = vmatpush1.bf16.xpose.msra.mxu0 0
    %561 = vmatprep.subr.bf16.mxu0 0
    %562 = vmatpush1.bf16.xpose.msra.mxu0 0
    %563 = vmatprep.subr.bf16.mxu0 0
    %564 = vmatpush1.bf16.xpose.msra.mxu0 0
    %565 = vmatprep.subr.bf16.mxu0 0
    %566 = vmatpush1.bf16.xpose.msra.mxu0 0
    %567 = vmatprep.subr.bf16.mxu0 0
    %568 = vmatpush1.bf16.xpose.msra.mxu0 0
    %569 = vmatprep.subr.bf16.mxu0 0
    %570 = vmatpush1.bf16.xpose.msra.mxu0 0
    %571 = vmatprep.subr.bf16.mxu0 0
    %572 = vmatpush1.bf16.xpose.msra.mxu0 0
    %573 = vmatprep.subr.bf16.mxu0 0
    %574 = vmatpush1.bf16.xpose.msra.mxu0 0
    %575 = vmatprep.mubr.bf16.mxu0 0
    %576 = vmatmul.mubr.bf16.gmra.mrb[0].mxu0 %v538
    %v577 = vpop.f32.mrb[0].mxu0
    %v578 = vadd.f32 %v88, %v577
    %v579 = vpop.f32.mrb[0].mxu0
    %v580 = vpop.f32.mrb[0].mxu0
    %v581 = vpop.f32.mrb[0].mxu0
    %582 = vdwg.mxu0
    %v583 = vsel %vm281, %v578, -inf
    %584 = vmax.xlane.f32.xlu0 %v583
    %v585 = vpop.xlane.xlu0 %584
    %v586 = vsub.f32 %v578, %v585
    %v587 = vmul.f32 %v586, 1.442695
    %v588 = vpow.pop %v587
    %v589 = vsel %vm281, %v588, 0.0
    %590 = vadd.xlane.f32.xlu0 %v589
    %v591 = vpop.xlane.xlu0 %590
    %v592 = vrcp.pop %v591
    %v593 = vmul.f32 %v588, %v592
    %v594 = vpack.c.bf16 %v593, %v593
    %595 = vrot.lane.b32.xlu0 %v339, 48
    %v596 = vpop.permute.xlu0 %595
    %v598 = vsel %vm281, %v594, 0
    %v601 = vsel %vm347, %v596, 0
    %603 = vmatprep.subr.bf16.mxu0 0
    %604 = vmatpush1.bf16.msra.mxu0 %v601
    %605 = vmatprep.subr.bf16.mxu0 0
    %606 = vmatpush1.bf16.msra.mxu0 0
    %607 = vmatprep.subr.bf16.mxu0 0
    %608 = vmatpush1.bf16.msra.mxu0 0
    %609 = vmatprep.subr.bf16.mxu0 0
    %610 = vmatpush1.bf16.msra.mxu0 0
    %611 = vmatprep.subr.bf16.mxu0 0
    %612 = vmatpush1.bf16.msra.mxu0 0
    %613 = vmatprep.subr.bf16.mxu0 0
    %614 = vmatpush1.bf16.msra.mxu0 0
    %615 = vmatprep.subr.bf16.mxu0 0
    %616 = vmatpush1.bf16.msra.mxu0 0
    %617 = vmatprep.subr.bf16.mxu0 0
    %618 = vmatpush1.bf16.msra.mxu0 0
    %619 = vmatprep.subr.bf16.mxu0 0
    %620 = vmatpush1.bf16.msra.mxu0 0
    %621 = vmatprep.subr.bf16.mxu0 0
    %622 = vmatpush1.bf16.msra.mxu0 0
    %623 = vmatprep.subr.bf16.mxu0 0
    %624 = vmatpush1.bf16.msra.mxu0 0
    %625 = vmatprep.subr.bf16.mxu0 0
    %626 = vmatpush1.bf16.msra.mxu0 0
    %627 = vmatprep.subr.bf16.mxu0 0
    %628 = vmatpush1.bf16.msra.mxu0 0
    %629 = vmatprep.subr.bf16.mxu0 0
    %630 = vmatpush1.bf16.msra.mxu0 0
    %631 = vmatprep.subr.bf16.mxu0 0
    %632 = vmatpush1.bf16.msra.mxu0 0
    %633 = vmatprep.subr.bf16.mxu0 0
    %634 = vmatpush1.bf16.msra.mxu0 0
    %635 = vmatprep.mubr.bf16.mxu0 0
    %636 = vmatmul.mubr.bf16.gmra.mrb[0].mxu0 %v598
    %v637 = vpop.f32.mrb[0].mxu0
    %v638 = vadd.f32 0.0, %v637
    %v639 = vpop.f32.mrb[0].mxu0
    %v640 = vpop.f32.mrb[0].mxu0
    %v641 = vpop.f32.mrb[0].mxu0
    %642 = vdwg.mxu0
    %644 = vrot.lane.b32.xlu0 %v638, 16
    %v645 = vpop.permute.xlu0 %644
    %vm647 = vcmask 195712
    %648 = vst.msk [vmem:[#allocation2] sm:$0xff] %vm647, %v645
    %649 = vrot.lane.b32.xlu0 %v188, 116
    %v650 = vpop.permute.xlu0 %649
    %652 = vrot.lane.b32.xlu0 %v210, 104
    %v653 = vpop.permute.xlu0 %652
    %v655 = vsel %vm268, %v650, %v653
    %v656 = vpack.c.bf16 %v655, %v655
    %657 = vrot.lane.b32.xlu0 %v236, 84
    %v658 = vpop.permute.xlu0 %657
    %660 = vrot.lane.b32.xlu0 %v262, 72
    %v661 = vpop.permute.xlu0 %660
    %v663 = vsel %vm268, %v658, %v661
    %v664 = vpack.c.bf16 %v663, %v663
    %v666 = vsel %vm281, %v656, 0
    %v669 = vsel %vm281, %v664, 0
    %671 = vmatprep.subr.bf16.mxu0 0
    %672 = vmatpush1.bf16.xpose.msra.mxu0 %v669
    %673 = vmatprep.subr.bf16.mxu0 0
    %674 = vmatpush1.bf16.xpose.msra.mxu0 0
    %675 = vmatprep.subr.bf16.mxu0 0
    %676 = vmatpush1.bf16.xpose.msra.mxu0 0
    %677 = vmatprep.subr.bf16.mxu0 0
    %678 = vmatpush1.bf16.xpose.msra.mxu0 0
    %679 = vmatprep.subr.bf16.mxu0 0
    %680 = vmatpush1.bf16.xpose.msra.mxu0 0
    %681 = vmatprep.subr.bf16.mxu0 0
    %682 = vmatpush1.bf16.xpose.msra.mxu0 0
    %683 = vmatprep.subr.bf16.mxu0 0
    %684 = vmatpush1.bf16.xpose.msra.mxu0 0
    %685 = vmatprep.subr.bf16.mxu0 0
    %686 = vmatpush1.bf16.xpose.msra.mxu0 0
    %687 = vmatprep.subr.bf16.mxu0 0
    %688 = vmatpush1.bf16.xpose.msra.mxu0 0
    %689 = vmatprep.subr.bf16.mxu0 0
    %690 = vmatpush1.bf16.xpose.msra.mxu0 0
    %691 = vmatprep.subr.bf16.mxu0 0
    %692 = vmatpush1.bf16.xpose.msra.mxu0 0
    %693 = vmatprep.subr.bf16.mxu0 0
    %694 = vmatpush1.bf16.xpose.msra.mxu0 0
    %695 = vmatprep.subr.bf16.mxu0 0
    %696 = vmatpush1.bf16.xpose.msra.mxu0 0
    %697 = vmatprep.subr.bf16.mxu0 0
    %698 = vmatpush1.bf16.xpose.msra.mxu0 0
    %699 = vmatprep.subr.bf16.mxu0 0
    %700 = vmatpush1.bf16.xpose.msra.mxu0 0
    %701 = vmatprep.subr.bf16.mxu0 0
    %702 = vmatpush1.bf16.xpose.msra.mxu0 0
    %703 = vmatprep.mubr.bf16.mxu0 0
    %704 = vmatmul.mubr.bf16.gmra.mrb[0].mxu0 %v666
    %v705 = vpop.f32.mrb[0].mxu0
    %v706 = vadd.f32 %v88, %v705
    %v707 = vpop.f32.mrb[0].mxu0
    %v708 = vpop.f32.mrb[0].mxu0
    %v709 = vpop.f32.mrb[0].mxu0
    %710 = vdwg.mxu0
    %v711 = vsel %vm281, %v706, -inf
    %712 = vmax.xlane.f32.xlu0 %v711
    %v713 = vpop.xlane.xlu0 %712
    %v714 = vsub.f32 %v706, %v713
    %v715 = vmul.f32 %v714, 1.442695
    %v716 = vpow.pop %v715
    %v717 = vsel %vm281, %v716, 0.0
    %718 = vadd.xlane.f32.xlu0 %v717
    %v719 = vpop.xlane.xlu0 %718
    %v720 = vrcp.pop %v719
    %v721 = vmul.f32 %v716, %v720
    %v722 = vpack.c.bf16 %v721, %v721
    %723 = vrot.lane.b32.xlu0 %v339, 40
    %v724 = vpop.permute.xlu0 %723
    %v726 = vsel %vm281, %v722, 0
    %v729 = vsel %vm347, %v724, 0
    %731 = vmatprep.subr.bf16.mxu0 0
    %732 = vmatpush1.bf16.msra.mxu0 %v729
    %733 = vmatprep.subr.bf16.mxu0 0
    %734 = vmatpush1.bf16.msra.mxu0 0
    %735 = vmatprep.subr.bf16.mxu0 0
    %736 = vmatpush1.bf16.msra.mxu0 0
    %737 = vmatprep.subr.bf16.mxu0 0
    %738 = vmatpush1.bf16.msra.mxu0 0
    %739 = vmatprep.subr.bf16.mxu0 0
    %740 = vmatpush1.bf16.msra.mxu0 0
    %741 = vmatprep.subr.bf16.mxu0 0
    %742 = vmatpush1.bf16.msra.mxu0 0
    %743 = vmatprep.subr.bf16.mxu0 0
    %744 = vmatpush1.bf16.msra.mxu0 0
    %745 = vmatprep.subr.bf16.mxu0 0
    %746 = vmatpush1.bf16.msra.mxu0 0
    %747 = vmatprep.subr.bf16.mxu0 0
    %748 = vmatpush1.bf16.msra.mxu0 0
    %749 = vmatprep.subr.bf16.mxu0 0
    %750 = vmatpush1.bf16.msra.mxu0 0
    %751 = vmatprep.subr.bf16.mxu0 0
    %752 = vmatpush1.bf16.msra.mxu0 0
    %753 = vmatprep.subr.bf16.mxu0 0
    %754 = vmatpush1.bf16.msra.mxu0 0
    %755 = vmatprep.subr.bf16.mxu0 0
    %756 = vmatpush1.bf16.msra.mxu0 0
    %757 = vmatprep.subr.bf16.mxu0 0
    %758 = vmatpush1.bf16.msra.mxu0 0
    %759 = vmatprep.subr.bf16.mxu0 0
    %760 = vmatpush1.bf16.msra.mxu0 0
    %761 = vmatprep.subr.bf16.mxu0 0
    %762 = vmatpush1.bf16.msra.mxu0 0
    %763 = vmatprep.mubr.bf16.mxu0 0
    %764 = vmatmul.mubr.bf16.gmra.mrb[0].mxu0 %v726
    %v765 = vpop.f32.mrb[0].mxu0
    %v766 = vadd.f32 0.0, %v765
    %v767 = vpop.f32.mrb[0].mxu0
    %v768 = vpop.f32.mrb[0].mxu0
    %v769 = vpop.f32.mrb[0].mxu0
    %770 = vdwg.mxu0
    %772 = vrot.lane.b32.xlu0 %v766, 24
    %v773 = vpop.permute.xlu0 %772
    %vm775 = vcmask 261312
    %776 = vst.msk [vmem:[#allocation2] sm:$0xff] %vm775, %v773
    %778 = vrot.lane.b32.xlu0 %v211, 116
    %v779 = vpop.permute.xlu0 %778
    %v781 = vsel %vm268, %v189, %v779
    %v782 = vpack.c.bf16 %v781, %v781
    %784 = vrot.lane.b32.xlu0 %v237, 96
    %v785 = vpop.permute.xlu0 %784
    %788 = vrot.lane.b32.xlu0 %v263, 84
    %v789 = vpop.permute.xlu0 %788
    %v791 = vsel %vm268, %v785, %v789
    %v792 = vpack.c.bf16 %v791, %v791
    %v794 = vsel %vm281, %v782, 0
    %v797 = vsel %vm281, %v792, 0
    %799 = vmatprep.subr.bf16.mxu0 0
    %800 = vmatpush1.bf16.xpose.msra.mxu0 %v797
    %801 = vmatprep.subr.bf16.mxu0 0
    %802 = vmatpush1.bf16.xpose.msra.mxu0 0
    %803 = vmatprep.subr.bf16.mxu0 0
    %804 = vmatpush1.bf16.xpose.msra.mxu0 0
    %805 = vmatprep.subr.bf16.mxu0 0
    %806 = vmatpush1.bf16.xpose.msra.mxu0 0
    %807 = vmatprep.subr.bf16.mxu0 0
    %808 = vmatpush1.bf16.xpose.msra.mxu0 0
    %809 = vmatprep.subr.bf16.mxu0 0
    %810 = vmatpush1.bf16.xpose.msra.mxu0 0
    %811 = vmatprep.subr.bf16.mxu0 0
    %812 = vmatpush1.bf16.xpose.msra.mxu0 0
    %813 = vmatprep.subr.bf16.mxu0 0
    %814 = vmatpush1.bf16.xpose.msra.mxu0 0
    %815 = vmatprep.subr.bf16.mxu0 0
    %816 = vmatpush1.bf16.xpose.msra.mxu0 0
    %817 = vmatprep.subr.bf16.mxu0 0
    %818 = vmatpush1.bf16.xpose.msra.mxu0 0
    %819 = vmatprep.subr.bf16.mxu0 0
    %820 = vmatpush1.bf16.xpose.msra.mxu0 0
    %821 = vmatprep.subr.bf16.mxu0 0
    %822 = vmatpush1.bf16.xpose.msra.mxu0 0
    %823 = vmatprep.subr.bf16.mxu0 0
    %824 = vmatpush1.bf16.xpose.msra.mxu0 0
    %825 = vmatprep.subr.bf16.mxu0 0
    %826 = vmatpush1.bf16.xpose.msra.mxu0 0
    %827 = vmatprep.subr.bf16.mxu0 0
    %828 = vmatpush1.bf16.xpose.msra.mxu0 0
    %829 = vmatprep.subr.bf16.mxu0 0
    %830 = vmatpush1.bf16.xpose.msra.mxu0 0
    %831 = vmatprep.mubr.bf16.mxu0 0
    %832 = vmatmul.mubr.bf16.gmra.mrb[0].mxu0 %v794
    %v833 = vpop.f32.mrb[0].mxu0
    %v834 = vadd.f32 %v88, %v833
    %v835 = vpop.f32.mrb[0].mxu0
    %v836 = vpop.f32.mrb[0].mxu0
    %v837 = vpop.f32.mrb[0].mxu0
    %838 = vdwg.mxu0
    %v839 = vsel %vm281, %v834, -inf
    %840 = vmax.xlane.f32.xlu0 %v839
    %v841 = vpop.xlane.xlu0 %840
    %v842 = vsub.f32 %v834, %v841
    %v843 = vmul.f32 %v842, 1.442695
    %v844 = vpow.pop %v843
    %v845 = vsel %vm281, %v844, 0.0
    %846 = vadd.xlane.f32.xlu0 %v845
    %v847 = vpop.xlane.xlu0 %846
    %v848 = vrcp.pop %v847
    %v849 = vmul.f32 %v844, %v848
    %v850 = vpack.c.bf16 %v161, %v161
    %v851 = vpack.c.bf16 %v849, %v849
    %853 = vrot.lane.b32.xlu0 %v850, 64
    %v854 = vpop.permute.xlu0 %853
    %v856 = vsel %vm281, %v851, 0
    %v859 = vsel %vm347, %v854, 0
    %861 = vmatprep.subr.bf16.mxu0 0
    %862 = vmatpush1.bf16.msra.mxu0 %v859
    %863 = vmatprep.subr.bf16.mxu0 0
    %864 = vmatpush1.bf16.msra.mxu0 0
    %865 = vmatprep.subr.bf16.mxu0 0
    %866 = vmatpush1.bf16.msra.mxu0 0
    %867 = vmatprep.subr.bf16.mxu0 0
    %868 = vmatpush1.bf16.msra.mxu0 0
    %869 = vmatprep.subr.bf16.mxu0 0
    %870 = vmatpush1.bf16.msra.mxu0 0
    %871 = vmatprep.subr.bf16.mxu0 0
    %872 = vmatpush1.bf16.msra.mxu0 0
    %873 = vmatprep.subr.bf16.mxu0 0
    %874 = vmatpush1.bf16.msra.mxu0 0
    %875 = vmatprep.subr.bf16.mxu0 0
    %876 = vmatpush1.bf16.msra.mxu0 0
    %877 = vmatprep.subr.bf16.mxu0 0
    %878 = vmatpush1.bf16.msra.mxu0 0
    %879 = vmatprep.subr.bf16.mxu0 0
    %880 = vmatpush1.bf16.msra.mxu0 0
    %881 = vmatprep.subr.bf16.mxu0 0
    %882 = vmatpush1.bf16.msra.mxu0 0
    %883 = vmatprep.subr.bf16.mxu0 0
    %884 = vmatpush1.bf16.msra.mxu0 0
    %885 = vmatprep.subr.bf16.mxu0 0
    %886 = vmatpush1.bf16.msra.mxu0 0
    %887 = vmatprep.subr.bf16.mxu0 0
    %888 = vmatpush1.bf16.msra.mxu0 0
    %889 = vmatprep.subr.bf16.mxu0 0
    %890 = vmatpush1.bf16.msra.mxu0 0
    %891 = vmatprep.subr.bf16.mxu0 0
    %892 = vmatpush1.bf16.msra.mxu0 0
    %893 = vmatprep.mubr.bf16.mxu0 0
    %894 = vmatmul.mubr.bf16.gmra.mrb[0].mxu0 %v856
    %v895 = vpop.f32.mrb[0].mxu0
    %v896 = vadd.f32 0.0, %v895
    %v897 = vpop.f32.mrb[0].mxu0
    %v898 = vpop.f32.mrb[0].mxu0
    %v899 = vpop.f32.mrb[0].mxu0
    %900 = vdwg.mxu0
    %901 = vst.msk [vmem:[#allocation2 + $0x8] sm:$0xff] %vm281, %v896
    %903 = vrot.lane.b32.xlu0 %v189, 124
    %v904 = vpop.permute.xlu0 %903
    %906 = vrot.lane.b32.xlu0 %v211, 112
    %v907 = vpop.permute.xlu0 %906
    %v909 = vsel %vm268, %v904, %v907
    %v910 = vpack.c.bf16 %v909, %v909
    %911 = vrot.lane.b32.xlu0 %v237, 92
    %v912 = vpop.permute.xlu0 %911
    %914 = vrot.lane.b32.xlu0 %v263, 80
    %v915 = vpop.permute.xlu0 %914
    %v917 = vsel %vm268, %v912, %v915
    %v918 = vpack.c.bf16 %v917, %v917
    %v920 = vsel %vm281, %v910, 0
    %v923 = vsel %vm281, %v918, 0
    %925 = vmatprep.subr.bf16.mxu0 0
    %926 = vmatpush1.bf16.xpose.msra.mxu0 %v923
    %927 = vmatprep.subr.bf16.mxu0 0
    %928 = vmatpush1.bf16.xpose.msra.mxu0 0
    %929 = vmatprep.subr.bf16.mxu0 0
    %930 = vmatpush1.bf16.xpose.msra.mxu0 0
    %931 = vmatprep.subr.bf16.mxu0 0
    %932 = vmatpush1.bf16.xpose.msra.mxu0 0
    %933 = vmatprep.subr.bf16.mxu0 0
    %934 = vmatpush1.bf16.xpose.msra.mxu0 0
    %935 = vmatprep.subr.bf16.mxu0 0
    %936 = vmatpush1.bf16.xpose.msra.mxu0 0
    %937 = vmatprep.subr.bf16.mxu0 0
    %938 = vmatpush1.bf16.xpose.msra.mxu0 0
    %939 = vmatprep.subr.bf16.mxu0 0
    %940 = vmatpush1.bf16.xpose.msra.mxu0 0
    %941 = vmatprep.subr.bf16.mxu0 0
    %942 = vmatpush1.bf16.xpose.msra.mxu0 0
    %943 = vmatprep.subr.bf16.mxu0 0
    %944 = vmatpush1.bf16.xpose.msra.mxu0 0
    %945 = vmatprep.subr.bf16.mxu0 0
    %946 = vmatpush1.bf16.xpose.msra.mxu0 0
    %947 = vmatprep.subr.bf16.mxu0 0
    %948 = vmatpush1.bf16.xpose.msra.mxu0 0
    %949 = vmatprep.subr.bf16.mxu0 0
    %950 = vmatpush1.bf16.xpose.msra.mxu0 0
    %951 = vmatprep.subr.bf16.mxu0 0
    %952 = vmatpush1.bf16.xpose.msra.mxu0 0
    %953 = vmatprep.subr.bf16.mxu0 0
    %954 = vmatpush1.bf16.xpose.msra.mxu0 0
    %955 = vmatprep.subr.bf16.mxu0 0
    %956 = vmatpush1.bf16.xpose.msra.mxu0 0
    %957 = vmatprep.mubr.bf16.mxu0 0
    %958 = vmatmul.mubr.bf16.gmra.mrb[0].mxu0 %v920
    %v959 = vpop.f32.mrb[0].mxu0
    %v960 = vadd.f32 %v88, %v959
    %v961 = vpop.f32.mrb[0].mxu0
    %v962 = vpop.f32.mrb[0].mxu0
    %v963 = vpop.f32.mrb[0].mxu0
    %964 = vdwg.mxu0
    %v965 = vsel %vm281, %v960, -inf
    %966 = vmax.xlane.f32.xlu0 %v965
    %v967 = vpop.xlane.xlu0 %966
    %v968 = vsub.f32 %v960, %v967
    %v969 = vmul.f32 %v968, 1.442695
    %v970 = vpow.pop %v969
    %v971 = vsel %vm281, %v970, 0.0
    %972 = vadd.xlane.f32.xlu0 %v971
    %v973 = vpop.xlane.xlu0 %972
    %v974 = vrcp.pop %v973
    %v975 = vmul.f32 %v970, %v974
    %v976 = vpack.c.bf16 %v975, %v975
    %977 = vrot.lane.b32.xlu0 %v850, 56
    %v978 = vpop.permute.xlu0 %977
    %v980 = vsel %vm281, %v976, 0
    %v983 = vsel %vm347, %v978, 0
    %985 = vmatprep.subr.bf16.mxu0 0
    %986 = vmatpush1.bf16.msra.mxu0 %v983
    %987 = vmatprep.subr.bf16.mxu0 0
    %988 = vmatpush1.bf16.msra.mxu0 0
    %989 = vmatprep.subr.bf16.mxu0 0
    %990 = vmatpush1.bf16.msra.mxu0 0
    %991 = vmatprep.subr.bf16.mxu0 0
    %992 = vmatpush1.bf16.msra.mxu0 0
    %993 = vmatprep.subr.bf16.mxu0 0
    %994 = vmatpush1.bf16.msra.mxu0 0
    %995 = vmatprep.subr.bf16.mxu0 0
    %996 = vmatpush1.bf16.msra.mxu0 0
    %997 = vmatprep.subr.bf16.mxu0 0
    %998 = vmatpush1.bf16.msra.mxu0 0
    %999 = vmatprep.subr.bf16.mxu0 0
    %1000 = vmatpush1.bf16.msra.mxu0 0
    %1001 = vmatprep.subr.bf16.mxu0 0
    %1002 = vmatpush1.bf16.msra.mxu0 0
    %1003 = vmatprep.subr.bf16.mxu0 0
    %1004 = vmatpush1.bf16.msra.mxu0 0
    %1005 = vmatprep.subr.bf16.mxu0 0
    %1006 = vmatpush1.bf16.msra.mxu0 0
    %1007 = vmatprep.subr.bf16.mxu0 0
    %1008 = vmatpush1.bf16.msra.mxu0 0
    %1009 = vmatprep.subr.bf16.mxu0 0
    %1010 = vmatpush1.bf16.msra.mxu0 0
    %1011 = vmatprep.subr.bf16.mxu0 0
    %1012 = vmatpush1.bf16.msra.mxu0 0
    %1013 = vmatprep.subr.bf16.mxu0 0
    %1014 = vmatpush1.bf16.msra.mxu0 0
    %1015 = vmatprep.subr.bf16.mxu0 0
    %1016 = vmatpush1.bf16.msra.mxu0 0
    %1017 = vmatprep.mubr.bf16.mxu0 0
    %1018 = vmatmul.mubr.bf16.gmra.mrb[0].mxu0 %v980
    %v1019 = vpop.f32.mrb[0].mxu0
    %v1020 = vadd.f32 0.0, %v1019
    %v1021 = vpop.f32.mrb[0].mxu0
    %v1022 = vpop.f32.mrb[0].mxu0
    %v1023 = vpop.f32.mrb[0].mxu0
    %1024 = vdwg.mxu0
    %1026 = vrot.lane.b32.xlu0 %v1020, 8
    %v1027 = vpop.permute.xlu0 %1026
    %1029 = vst.msk [vmem:[#allocation2 + $0x8] sm:$0xff] %vm519, %v1027
    %1030 = vrot.lane.b32.xlu0 %v189, 120
    %v1031 = vpop.permute.xlu0 %1030
    %1033 = vrot.lane.b32.xlu0 %v211, 108
    %v1034 = vpop.permute.xlu0 %1033
    %v1036 = vsel %vm268, %v1031, %v1034
    %v1037 = vpack.c.bf16 %v1036, %v1036
    %1038 = vrot.lane.b32.xlu0 %v237, 88
    %v1039 = vpop.permute.xlu0 %1038
    %1041 = vrot.lane.b32.xlu0 %v263, 76
    %v1042 = vpop.permute.xlu0 %1041
    %v1044 = vsel %vm268, %v1039, %v1042
    %v1045 = vpack.c.bf16 %v1044, %v1044
    %v1047 = vsel %vm281, %v1037, 0
    %v1050 = vsel %vm281, %v1045, 0
    %1052 = vmatprep.subr.bf16.mxu0 0
    %1053 = vmatpush1.bf16.xpose.msra.mxu0 %v1050
    %1054 = vmatprep.subr.bf16.mxu0 0
    %1055 = vmatpush1.bf16.xpose.msra.mxu0 0
    %1056 = vmatprep.subr.bf16.mxu0 0
    %1057 = vmatpush1.bf16.xpose.msra.mxu0 0
    %1058 = vmatprep.subr.bf16.mxu0 0
    %1059 = vmatpush1.bf16.xpose.msra.mxu0 0
    %1060 = vmatprep.subr.bf16.mxu0 0
    %1061 = vmatpush1.bf16.xpose.msra.mxu0 0
    %1062 = vmatprep.subr.bf16.mxu0 0
    %1063 = vmatpush1.bf16.xpose.msra.mxu0 0
    %1064 = vmatprep.subr.bf16.mxu0 0
    %1065 = vmatpush1.bf16.xpose.msra.mxu0 0
    %1066 = vmatprep.subr.bf16.mxu0 0
    %1067 = vmatpush1.bf16.xpose.msra.mxu0 0
    %1068 = vmatprep.subr.bf16.mxu0 0
    %1069 = vmatpush1.bf16.xpose.msra.mxu0 0
    %1070 = vmatprep.subr.bf16.mxu0 0
    %1071 = vmatpush1.bf16.xpose.msra.mxu0 0
    %1072 = vmatprep.subr.bf16.mxu0 0
    %1073 = vmatpush1.bf16.xpose.msra.mxu0 0
    %1074 = vmatprep.subr.bf16.mxu0 0
    %1075 = vmatpush1.bf16.xpose.msra.mxu0 0
    %1076 = vmatprep.subr.bf16.mxu0 0
    %1077 = vmatpush1.bf16.xpose.msra.mxu0 0
    %1078 = vmatprep.subr.bf16.mxu0 0
    %1079 = vmatpush1.bf16.xpose.msra.mxu0 0
    %1080 = vmatprep.subr.bf16.mxu0 0
    %1081 = vmatpush1.bf16.xpose.msra.mxu0 0
    %1082 = vmatprep.subr.bf16.mxu0 0
    %1083 = vmatpush1.bf16.xpose.msra.mxu0 0
    %1084 = vmatprep.mubr.bf16.mxu0 0
    %1085 = vmatmul.mubr.bf16.gmra.mrb[0].mxu0 %v1047
    %v1086 = vpop.f32.mrb[0].mxu0
    %v1087 = vadd.f32 %v88, %v1086
    %v1088 = vpop.f32.mrb[0].mxu0
    %v1089 = vpop.f32.mrb[0].mxu0
    %v1090 = vpop.f32.mrb[0].mxu0
    %1091 = vdwg.mxu0
    %v1092 = vsel %vm281, %v1087, -inf
    %1093 = vmax.xlane.f32.xlu0 %v1092
    %v1094 = vpop.xlane.xlu0 %1093
    %v1095 = vsub.f32 %v1087, %v1094
    %v1096 = vmul.f32 %v1095, 1.442695
    %v1097 = vpow.pop %v1096
    %v1098 = vsel %vm281, %v1097, 0.0
    %1099 = vadd.xlane.f32.xlu0 %v1098
    %v1100 = vpop.xlane.xlu0 %1099
    %v1101 = vrcp.pop %v1100
    %v1102 = vmul.f32 %v1097, %v1101
    %v1103 = vpack.c.bf16 %v1102, %v1102
    %1104 = vrot.lane.b32.xlu0 %v850, 48
    %v1105 = vpop.permute.xlu0 %1104
    %v1107 = vsel %vm281, %v1103, 0
    %v1110 = vsel %vm347, %v1105, 0
    %1112 = vmatprep.subr.bf16.mxu0 0
    %1113 = vmatpush1.bf16.msra.mxu0 %v1110
    %1114 = vmatprep.subr.bf16.mxu0 0
    %1115 = vmatpush1.bf16.msra.mxu0 0
    %1116 = vmatprep.subr.bf16.mxu0 0
    %1117 = vmatpush1.bf16.msra.mxu0 0
    %1118 = vmatprep.subr.bf16.mxu0 0
    %1119 = vmatpush1.bf16.msra.mxu0 0
    %1120 = vmatprep.subr.bf16.mxu0 0
    %1121 = vmatpush1.bf16.msra.mxu0 0
    %1122 = vmatprep.subr.bf16.mxu0 0
    %1123 = vmatpush1.bf16.msra.mxu0 0
    %1124 = vmatprep.subr.bf16.mxu0 0
    %1125 = vmatpush1.bf16.msra.mxu0 0
    %1126 = vmatprep.subr.bf16.mxu0 0
    %1127 = vmatpush1.bf16.msra.mxu0 0
    %1128 = vmatprep.subr.bf16.mxu0 0
    %1129 = vmatpush1.bf16.msra.mxu0 0
    %1130 = vmatprep.subr.bf16.mxu0 0
    %1131 = vmatpush1.bf16.msra.mxu0 0
    %1132 = vmatprep.subr.bf16.mxu0 0
    %1133 = vmatpush1.bf16.msra.mxu0 0
    %1134 = vmatprep.subr.bf16.mxu0 0
    %1135 = vmatpush1.bf16.msra.mxu0 0
    %1136 = vmatprep.subr.bf16.mxu0 0
    %1137 = vmatpush1.bf16.msra.mxu0 0
    %1138 = vmatprep.subr.bf16.mxu0 0
    %1139 = vmatpush1.bf16.msra.mxu0 0
    %1140 = vmatprep.subr.bf16.mxu0 0
    %1141 = vmatpush1.bf16.msra.mxu0 0
    %1142 = vmatprep.subr.bf16.mxu0 0
    %1143 = vmatpush1.bf16.msra.mxu0 0
    %1144 = vmatprep.mubr.bf16.mxu0 0
    %1145 = vmatmul.mubr.bf16.gmra.mrb[0].mxu0 %v1107
    %v1146 = vpop.f32.mrb[0].mxu0
    %v1147 = vadd.f32 0.0, %v1146
    %v1148 = vpop.f32.mrb[0].mxu0
    %v1149 = vpop.f32.mrb[0].mxu0
    %v1150 = vpop.f32.mrb[0].mxu0
    %1151 = vdwg.mxu0
    %1153 = vrot.lane.b32.xlu0 %v1147, 16
    %v1154 = vpop.permute.xlu0 %1153
    %1156 = vst.msk [vmem:[#allocation2 + $0x8] sm:$0xff] %vm647, %v1154
    %1157 = vrot.lane.b32.xlu0 %v189, 116
    %v1158 = vpop.permute.xlu0 %1157
    %1160 = vrot.lane.b32.xlu0 %v211, 104
    %v1161 = vpop.permute.xlu0 %1160
    %v1163 = vsel %vm268, %v1158, %v1161
    %v1164 = vpack.c.bf16 %v1163, %v1163
    %1165 = vrot.lane.b32.xlu0 %v237, 84
    %v1166 = vpop.permute.xlu0 %1165
    %1168 = vrot.lane.b32.xlu0 %v263, 72
    %v1169 = vpop.permute.xlu0 %1168
    %v1171 = vsel %vm268, %v1166, %v1169
    %v1172 = vpack.c.bf16 %v1171, %v1171
    %v1174 = vsel %vm281, %v1164, 0
    %v1177 = vsel %vm281, %v1172, 0
    %1179 = vmatprep.subr.bf16.mxu0 0
    %1180 = vmatpush1.bf16.xpose.msra.mxu0 %v1177
    %1181 = vmatprep.subr.bf16.mxu0 0
    %1182 = vmatpush1.bf16.xpose.msra.mxu0 0
    %1183 = vmatprep.subr.bf16.mxu0 0
    %1184 = vmatpush1.bf16.xpose.msra.mxu0 0
    %1185 = vmatprep.subr.bf16.mxu0 0
    %1186 = vmatpush1.bf16.xpose.msra.mxu0 0
    %1187 = vmatprep.subr.bf16.mxu0 0
    %1188 = vmatpush1.bf16.xpose.msra.mxu0 0
    %1189 = vmatprep.subr.bf16.mxu0 0
    %1190 = vmatpush1.bf16.xpose.msra.mxu0 0
    %1191 = vmatprep.subr.bf16.mxu0 0
    %1192 = vmatpush1.bf16.xpose.msra.mxu0 0
    %1193 = vmatprep.subr.bf16.mxu0 0
    %1194 = vmatpush1.bf16.xpose.msra.mxu0 0
    %1195 = vmatprep.subr.bf16.mxu0 0
    %1196 = vmatpush1.bf16.xpose.msra.mxu0 0
    %1197 = vmatprep.subr.bf16.mxu0 0
    %1198 = vmatpush1.bf16.xpose.msra.mxu0 0
    %1199 = vmatprep.subr.bf16.mxu0 0
    %1200 = vmatpush1.bf16.xpose.msra.mxu0 0
    %1201 = vmatprep.subr.bf16.mxu0 0
    %1202 = vmatpush1.bf16.xpose.msra.mxu0 0
    %1203 = vmatprep.subr.bf16.mxu0 0
    %1204 = vmatpush1.bf16.xpose.msra.mxu0 0
    %1205 = vmatprep.subr.bf16.mxu0 0
    %1206 = vmatpush1.bf16.xpose.msra.mxu0 0
    %1207 = vmatprep.subr.bf16.mxu0 0
    %1208 = vmatpush1.bf16.xpose.msra.mxu0 0
    %1209 = vmatprep.subr.bf16.mxu0 0
    %1210 = vmatpush1.bf16.xpose.msra.mxu0 0
    %1211 = vmatprep.mubr.bf16.mxu0 0
    %1212 = vmatmul.mubr.bf16.gmra.mrb[0].mxu0 %v1174
    %v1213 = vpop.f32.mrb[0].mxu0
    %v1214 = vadd.f32 %v88, %v1213
    %v1215 = vpop.f32.mrb[0].mxu0
    %v1216 = vpop.f32.mrb[0].mxu0
    %v1217 = vpop.f32.mrb[0].mxu0
    %1218 = vdwg.mxu0
    %v1219 = vsel %vm281, %v1214, -inf
    %1220 = vmax.xlane.f32.xlu0 %v1219
    %v1221 = vpop.xlane.xlu0 %1220
    %v1222 = vsub.f32 %v1214, %v1221
    %v1223 = vmul.f32 %v1222, 1.442695
    %v1224 = vpow.pop %v1223
    %v1225 = vsel %vm281, %v1224, 0.0
    %1226 = vadd.xlane.f32.xlu0 %v1225
    %v1227 = vpop.xlane.xlu0 %1226
    %v1228 = vrcp.pop %v1227
    %v1229 = vmul.f32 %v1224, %v1228
    %v1230 = vpack.c.bf16 %v1229, %v1229
    %1231 = vrot.lane.b32.xlu0 %v850, 40
    %v1232 = vpop.permute.xlu0 %1231
    %v1234 = vsel %vm281, %v1230, 0
    %v1237 = vsel %vm347, %v1232, 0
    %1239 = vmatprep.subr.bf16.mxu0 0
    %1240 = vmatpush1.bf16.msra.mxu0 %v1237
    %1241 = vmatprep.subr.bf16.mxu0 0
    %1242 = vmatpush1.bf16.msra.mxu0 0
    %1243 = vmatprep.subr.bf16.mxu0 0
    %1244 = vmatpush1.bf16.msra.mxu0 0
    %1245 = vmatprep.subr.bf16.mxu0 0
    %1246 = vmatpush1.bf16.msra.mxu0 0
    %1247 = vmatprep.subr.bf16.mxu0 0
    %1248 = vmatpush1.bf16.msra.mxu0 0
    %1249 = vmatprep.subr.bf16.mxu0 0
    %1250 = vmatpush1.bf16.msra.mxu0 0
    %1251 = vmatprep.subr.bf16.mxu0 0
    %1252 = vmatpush1.bf16.msra.mxu0 0
    %1253 = vmatprep.subr.bf16.mxu0 0
    %1254 = vmatpush1.bf16.msra.mxu0 0
    %1255 = vmatprep.subr.bf16.mxu0 0
    %1256 = vmatpush1.bf16.msra.mxu0 0
    %1257 = vmatprep.subr.bf16.mxu0 0
    %1258 = vmatpush1.bf16.msra.mxu0 0
    %1259 = vmatprep.subr.bf16.mxu0 0
    %1260 = vmatpush1.bf16.msra.mxu0 0
    %1261 = vmatprep.subr.bf16.mxu0 0
    %1262 = vmatpush1.bf16.msra.mxu0 0
    %1263 = vmatprep.subr.bf16.mxu0 0
    %1264 = vmatpush1.bf16.msra.mxu0 0
    %1265 = vmatprep.subr.bf16.mxu0 0
    %1266 = vmatpush1.bf16.msra.mxu0 0
    %1267 = vmatprep.subr.bf16.mxu0 0
    %1268 = vmatpush1.bf16.msra.mxu0 0
    %1269 = vmatprep.subr.bf16.mxu0 0
    %1270 = vmatpush1.bf16.msra.mxu0 0
    %1271 = vmatprep.mubr.bf16.mxu0 0
    %1272 = vmatmul.mubr.bf16.gmra.mrb[0].mxu0 %v1234
    %v1273 = vpop.f32.mrb[0].mxu0
    %v1274 = vadd.f32 0.0, %v1273
    %v1275 = vpop.f32.mrb[0].mxu0
    %v1276 = vpop.f32.mrb[0].mxu0
    %v1277 = vpop.f32.mrb[0].mxu0
    %1278 = vdwg.mxu0
    %1280 = vrot.lane.b32.xlu0 %v1274, 24
    %v1281 = vpop.permute.xlu0 %1280
    %1283 = vst.msk [vmem:[#allocation2 + $0x8] sm:$0xff] %vm775, %v1281
    %v1284 = vld [vmem:[#allocation2] sm:$0xff]
    %v1285 = vld [vmem:[#allocation2 + $0x8] sm:$0xff]
    %v1286 = vpack.c.bf16 %v1285, %v1284
    %v1287 = vld [vmem:[#allocation8] sm:$0xf]
    %v1288 = vld [vmem:[#allocation8 + $0x4] sm:$0xf]
    %v1289 = vld [vmem:[#allocation8 + $0x8] sm:$0xf]
    %v1290 = vld [vmem:[#allocation8 + $0xc] sm:$0xf]
    %v1291 = vld [vmem:[%s4] sm:$0x1]
    %v1293 = vlaneseq
    %v1294 = vshrl.u32 %v1293, 7
    %v1295 = vsub.s32 0, %v1294
    %v1296 = vrot.slane %v1291, %v1295
    %v1302 = vunpack.c.l.b16 %v1287
    %v1303 = vunpack.c.l.b16 %v1288
    %v1304 = vunpack.c.l.b16 %v1289
    %v1305 = vunpack.c.l.b16 %v1290
    %v1306 = vpack.c.b16 %v1303, %v1302
    %v1307 = vpack.c.b16 %v1305, %v1304
    %v1311 = vsel %vm119, %v1286, 0
    %1313 = vmatprep.subr.bf16.mxu0 0
    %1314 = vmatpush1.bf16.msra.mxu0 %v1306
    %1315 = vmatprep.subr.bf16.mxu0 0
    %1316 = vmatpush1.bf16.msra.mxu0 %v1307
    %1317 = vmatprep.subr.bf16.mxu0 0
    %1318 = vmatpush1.bf16.msra.mxu0 0
    %1319 = vmatprep.subr.bf16.mxu0 0
    %1320 = vmatpush1.bf16.msra.mxu0 0
    %1321 = vmatprep.subr.bf16.mxu0 0
    %1322 = vmatpush1.bf16.msra.mxu0 0
    %1323 = vmatprep.subr.bf16.mxu0 0
    %1324 = vmatpush1.bf16.msra.mxu0 0
    %1325 = vmatprep.subr.bf16.mxu0 0
    %1326 = vmatpush1.bf16.msra.mxu0 0
    %1327 = vmatprep.subr.bf16.mxu0 0
    %1328 = vmatpush1.bf16.msra.mxu0 0
    %1329 = vmatprep.subr.bf16.mxu0 0
    %1330 = vmatpush1.bf16.msra.mxu0 0
    %1331 = vmatprep.subr.bf16.mxu0 0
    %1332 = vmatpush1.bf16.msra.mxu0 0
    %1333 = vmatprep.subr.bf16.mxu0 0
    %1334 = vmatpush1.bf16.msra.mxu0 0
    %1335 = vmatprep.subr.bf16.mxu0 0
    %1336 = vmatpush1.bf16.msra.mxu0 0
    %1337 = vmatprep.subr.bf16.mxu0 0
    %1338 = vmatpush1.bf16.msra.mxu0 0
    %1339 = vmatprep.subr.bf16.mxu0 0
    %1340 = vmatpush1.bf16.msra.mxu0 0
    %1341 = vmatprep.subr.bf16.mxu0 0
    %1342 = vmatpush1.bf16.msra.mxu0 0
    %1343 = vmatprep.subr.bf16.mxu0 0
    %1344 = vmatpush1.bf16.msra.mxu0 0
    %1345 = vmatprep.mubr.bf16.mxu0 0
    %1346 = vmatmul.mubr.bf16.gmra.mrb[0].mxu0 %v1311
    %v1347 = vpop.f32.mrb[0].mxu0
    %v1348 = vadd.f32 %v1296, %v1347
    %v1349 = vpop.f32.mrb[0].mxu0
    %v1350 = vpop.f32.mrb[0].mxu0
    %v1351 = vadd.f32 %v1296, %v1350
    %v1352 = vpop.f32.mrb[0].mxu0
    %1353 = vdwg.mxu0
    %1354 = vst.msk [vmem:[#allocation11] sm:$0xff] %vm119, %v1348
    %1355 = vst.msk [vmem:[#allocation11 + $0x8] sm:$0xff] %vm119, %v1351
    // Predicated region
    $region46: #{tpu_custom_call.1} parent=1 // pred_check
      _
    $region47: #{tpu_custom_call.1} parent=1 // pred_check_branch
      %1357 = sbr.rel (0) target = $region49
    $region48: #{tpu_custom_call.1} parent=1 // pred_region
      %s1359 = ssub.s32 256, 256
      %1360 = vsyncadd [#allocation5], %s1359
      %s1361 = sshll.u32 [#allocation11], 4
      %s1362 = int_to_ptr.vmem [resolvable:$true] %s1361
      %1367 = dma.vmem_to_hbm [thread:$0]  %s1362, 256, %s7, [#allocation5], 128, 128, 8
    $region49: #{tpu_custom_call.1} parent=1 // pred_fallthru
      _
    // Predicated region
    $region50: #{tpu_custom_call.1} parent=1 // pred_check
      _
    $region51: #{tpu_custom_call.1} parent=1 // pred_check_branch
      %1369 = sbr.rel (0) target = $region53
    $region52: #{tpu_custom_call.1} parent=1 // pred_region
      %1370 = dma.done [#allocation5], 256
    $region53: #{tpu_custom_call.1} parent=1 // pred_fallthru
      _
    %1371 = vsyncpa [#allocation4], 1
    %1372 = vsyncpa [#allocation7], 1
    %1373 = vsyncpa [#allocation10], 1
    %1374 = vsyncpa [#allocation5], 1

</llo_original>
